<compile_context>
chip_gen: v7x
topology: tpu7x:2x2x1
jax: 0.10.0
libtpu: 0.0.40
codegen_flags: <defaults>
</compile_context>

<pallas_src>
import numpy as np
import jax
import jax.numpy as jnp
from jax import lax
from jax.experimental import pallas as pl
from jax.experimental.pallas import tpu as pltpu


def _postproc_kernel(mr_ref, mi_ref, nr_ref, ni_ref, cos_ref, sin_ref, out_ref):
    limit = 9.9
    K = 10.0
    f32 = jnp.float32

    # decompress_cIRM (FullSubNet): clamp to [-limit, limit], -K*log((K-m)/(K+m)).
    # Keep this in f32 regardless of input dtype (v5e has no bf16 VPU/EUP).
    mr = jnp.clip(mr_ref[0].astype(f32), -limit, limit)
    mi = jnp.clip(mi_ref[0].astype(f32), -limit, limit)
    mr = -K * jnp.log((K - mr) / (K + mr))
    mi = -K * jnp.log((K - mi) / (K + mi))

    nr = nr_ref[0].astype(f32)
    ni = ni_ref[0].astype(f32)

    # complex ratio mask applied to the noisy spectrum, [F, T]
    er = mr * nr - mi * ni
    ei = mi * nr + mr * ni

    Fb, T = er.shape
    Kc = Fb - 1                    # 256: clean MXU contraction depth

    er_main = er[:Kc, :]           # real parts, bins 0..255
    ei_main = ei[:Kc, :]           # imag parts, bins 0..255 (bin 0 is unused: sin(0)=0)
    er_nyq = er[Kc:, :]            # [1, T] real part of the Nyquist bin

    # The sin basis' row 0 is identically zero; the wrapper re-purposes it to carry
    # the Nyquist cosine column ((-1)^n / N), so slot the Nyquist real part into
    # row 0 of the sin operand.  Pure VPU select + sublane broadcast (no relayout).
    ridx = lax.broadcasted_iota(jnp.int32, (Kc, T), 0)
    ei_mod = jnp.where(ridx == 0, er_nyq, ei_main)

    # Per-frame inverse real DFT on the MXU, contracting F in place:
    # [F, T] x [F, N] -> [T, N]  (lhs-transposed dot, bf16 operands, f32 accumulate).
    tn_dims = (((0,), (0,)), ((), ()))
    bf16 = jnp.bfloat16
    frames = lax.dot_general(er_main.astype(bf16), cos_ref[...], tn_dims,
                             preferred_element_type=f32)
    frames = frames + lax.dot_general(ei_mod.astype(bf16), sin_ref[...], tn_dims,
                                      preferred_element_type=f32)

    N = frames.shape[1]
    hop = N // 2
    second = frames[:, hop:]       # second half of frame j -> output chunk j

    # Overlap-add with torch.istft's rectangular (window=None) envelope:
    # interior chunks are covered by 2 frames -> *0.5, the last chunk by 1.
    row = lax.broadcasted_iota(jnp.int32, (T, hop), 0)
    w = jnp.where(row == T - 1, 1.0, 0.5).astype(f32)
    out_ref[0] = (second * w).astype(out_ref.dtype)
    if T > 1:
        # chunks 0..T-2 also receive half of the *next* frame's first half
        # (sublane-shifted slice + masked partial store; no MXU, no roll).
        out_ref[0, :T - 1, :] += (frames[1:, :hop] * 0.5).astype(out_ref.dtype)


def fullsubnet_postproc(model_output, bypassed_features=None, *,
                        n_fft=512, hop_length=256, win_length=512,
                        waveform_len=32767):
    """Mirrors FullSubNetPostProc.forward(model_output, bypassed_features)."""
    del bypassed_features                      # unused, as in the torch module
    cRM, (noisy_real, noisy_imag) = model_output
    assert win_length == n_fft and hop_length * 2 == n_fft, \
        "kernel OLA assumes the module defaults (hop == n_fft//2, win == n_fft)"
    B, F, T, two = cRM.shape
    assert two == 2 and F == n_fft // 2 + 1
    N = n_fft
    hop = hop_length
    Kc = N // 2                                # 256
    f32 = jnp.float32

    # Keep the native [B, F, T] layout and upstream dtype (no transposes, no
    # upcasts): the kernel contracts F in place.  These slices are cheap.
    mr = cRM[..., 0]
    mi = cRM[..., 1]
    nr = noisy_real[:, 0]
    ni = noisy_imag[:, 0]

    # Inverse real-DFT bases in bf16 (irfft semantics: imag parts of DC / Nyquist
    # bins ignored).  Only bins 0..255 enter the contraction; the Nyquist cosine
    # column (+1/N, -1/N, ...) is parked in row 0 of the sin basis, whose own
    # row 0 (sin(0) = 0) is identically zero, keeping K = 256.
    k = np.arange(Kc)[:, None].astype(np.float64)
    n = np.arange(N)[None, :].astype(np.float64)
    ang = 2.0 * np.pi * k * n / N
    coef = np.where(k == 0, 1.0, 2.0) / N
    cos_np = coef * np.cos(ang)                              # [256, N]
    sin_np = -coef * np.sin(ang)                             # [256, N]
    sin_np[0, :] = np.where(np.arange(N) % 2 == 0, 1.0, -1.0) / N   # Nyquist cos row
    cos_b = jnp.asarray(cos_np, dtype=jnp.bfloat16)
    sin_b = jnp.asarray(sin_np, dtype=jnp.bfloat16)

    # TODO(synk): for very long utterances (T in the thousands) add a T-tile grid
    # axis with a one-frame halo so per-step VMEM stays bounded on v7x (64 MiB).
    chunks = pl.pallas_call(
        _postproc_kernel,
        out_shape=jax.ShapeDtypeStruct((B, T, hop), f32),
        grid=(B,),
        in_specs=[
            pl.BlockSpec((1, F, T), lambda b: (b, 0, 0)),
            pl.BlockSpec((1, F, T), lambda b: (b, 0, 0)),
            pl.BlockSpec((1, F, T), lambda b: (b, 0, 0)),
            pl.BlockSpec((1, F, T), lambda b: (b, 0, 0)),
            pl.BlockSpec((Kc, N), lambda b: (0, 0)),
            pl.BlockSpec((Kc, N), lambda b: (0, 0)),
        ],
        out_specs=pl.BlockSpec((1, T, hop), lambda b: (b, 0, 0)),
        compiler_params=pltpu.CompilerParams(
            dimension_semantics=("parallel",),   # B >= 2 keeps both v7x TCs busy
            vmem_limit_bytes=48 * 1024 * 1024,   # headroom under v7x's 64 MiB
        ),
    )(mr, mi, nr, ni, cos_b, sin_b)

    wav = chunks.reshape(B, T * hop)           # center padding already dropped
    avail = T * hop
    if waveform_len <= avail:
        wav = wav[:, :waveform_len]
    else:
        wav = jnp.pad(wav, ((0, 0), (0, waveform_len - avail)))
    return wav[:, None, :]                     # unsqueeze(-2): [B, 1, waveform_len]


def _reference_postproc(cRM, noisy_real, noisy_imag, n_fft, hop, length):
    """Pure-JAX reference (explicit Hermitian iFFT + overlap-add)."""
    limit, K = 9.9, 10.0
    m = jnp.clip(cRM.astype(jnp.float32), -limit, limit)
    m = -K * jnp.log((K - m) / (K + m))
    nr = noisy_real[:, 0].astype(jnp.float32)
    ni = noisy_imag[:, 0].astype(jnp.float32)
    er = m[..., 0] * nr - m[..., 1] * ni        # [B, F, T]
    ei = m[..., 1] * nr + m[..., 0] * ni
    spec = er + 1j * ei
    full = jnp.concatenate([spec, jnp.conj(spec[:, -2:0:-1, :])], axis=1)  # [B, N, T]
    frames = jnp.fft.ifft(full, axis=1).real    # [B, N, T]
    B, N, T = frames.shape
    L = N + hop * (T - 1)
    y = jnp.zeros((B, L), jnp.float32)
    w = jnp.zeros((L,), jnp.float32)
    for t in range(T):
        y = y.at[:, t * hop:t * hop + N].add(frames[:, :, t])
        w = w.at[t * hop:t * hop + N].add(1.0)
    y = y / w[None, :]
    start = n_fft // 2
    return y[:, start:start + length][:, None, :]


if __name__ == "__main__":
    N_FFT, HOP = 512, 256
    F = N_FFT // 2 + 1
    B, T = 2, 8                        # small shapes: 2 utterances, 8 STFT frames
    WAVEFORM_LEN = T * HOP - 1         # 2047 samples, consistent with the iSTFT length arg

    key = jax.random.PRNGKey(0)
    k1, k2, k3 = jax.random.split(key, 3)
    cRM = jax.random.normal(k1, (B, F, T, 2), jnp.float32)
    noisy_real = jax.random.normal(k2, (B, 1, F, T), jnp.float32)
    noisy_imag = jax.random.normal(k3, (B, 1, F, T), jnp.float32)

    out = fullsubnet_postproc((cRM, (noisy_real, noisy_imag)), None,
                              n_fft=N_FFT, hop_length=HOP, win_length=N_FFT,
                              waveform_len=WAVEFORM_LEN)
    out = jax.block_until_ready(out)
    assert out.shape == (B, 1, WAVEFORM_LEN), out.shape

    ref = _reference_postproc(cRM, noisy_real, noisy_imag, N_FFT, HOP, WAVEFORM_LEN)
    # atol loosened slightly vs. the pure-f32 version to cover bf16 matmul operands
    # (f32 accumulation); still far below the error of any structural OLA/Nyquist bug.
    np.testing.assert_allclose(np.asarray(out), np.asarray(ref), rtol=2e-2, atol=8e-3)

    print("KERNEL_OK")
</pallas_src>

<mosaic_0001>
module attributes {stable_mosaic.version = 11 : i64} {
  func.func @_postproc_kernel(%arg0: i32, %arg1: memref<1x257x8xf32, #tpu.memory_space<vmem>>, %arg2: memref<1x257x8xf32, #tpu.memory_space<vmem>>, %arg3: memref<1x257x8xf32, #tpu.memory_space<vmem>>, %arg4: memref<1x257x8xf32, #tpu.memory_space<vmem>>, %arg5: memref<256x512xbf16, #tpu.memory_space<vmem>>, %arg6: memref<256x512xbf16, #tpu.memory_space<vmem>>, %arg7: memref<1x8x256xf32, #tpu.memory_space<vmem>>) attributes {dimension_semantics = [#tpu.dimension_semantics<parallel>], iteration_bounds = array<i64: 2>, scalar_prefetch = 0 : i64, scratch_operands = 0 : i64, tpu.core_type = #tpu.core_type<tc>, window_params = [{transform_indices = @transform_0, window_bounds = array<i64: 1, 257, 8>}, {transform_indices = @transform_1, window_bounds = array<i64: 1, 257, 8>}, {transform_indices = @transform_2, window_bounds = array<i64: 1, 257, 8>}, {transform_indices = @transform_3, window_bounds = array<i64: 1, 257, 8>}, {pipeline_mode = #tpu.pipeline_mode<synchronous>, transform_indices = @transform_4, window_bounds = array<i64: 256, 512>}, {pipeline_mode = #tpu.pipeline_mode<synchronous>, transform_indices = @transform_5, window_bounds = array<i64: 256, 512>}, {transform_indices = @transform_6, window_bounds = array<i64: 1, 8, 256>}]} {
    %c0 = arith.constant 0 : index
    %c0_0 = arith.constant 0 : index
    %c0_1 = arith.constant 0 : index
    %0 = vector.load %arg1[%c0, %c0_0, %c0_1] : memref<1x257x8xf32, #tpu.memory_space<vmem>>, vector<1x257x8xf32>
    %1 = vector.shape_cast %0 : vector<1x257x8xf32> to vector<257x8xf32>
    %cst = arith.constant -9.89999961 : f32
    %cst_2 = arith.constant 9.89999961 : f32
    %2 = vector.broadcast %cst : f32 to vector<257x8xf32>
    %3 = arith.maximumf %2, %1 : vector<257x8xf32>
    %4 = vector.broadcast %cst_2 : f32 to vector<257x8xf32>
    %5 = arith.minimumf %4, %3 : vector<257x8xf32>
    %c0_3 = arith.constant 0 : index
    %c0_4 = arith.constant 0 : index
    %c0_5 = arith.constant 0 : index
    %6 = vector.load %arg2[%c0_3, %c0_4, %c0_5] : memref<1x257x8xf32, #tpu.memory_space<vmem>>, vector<1x257x8xf32>
    %7 = vector.shape_cast %6 : vector<1x257x8xf32> to vector<257x8xf32>
    %cst_6 = arith.constant -9.89999961 : f32
    %cst_7 = arith.constant 9.89999961 : f32
    %8 = vector.broadcast %cst_6 : f32 to vector<257x8xf32>
    %9 = arith.maximumf %8, %7 : vector<257x8xf32>
    %10 = vector.broadcast %cst_7 : f32 to vector<257x8xf32>
    %11 = arith.minimumf %10, %9 : vector<257x8xf32>
    %cst_8 = arith.constant 1.000000e+01 : f32
    %12 = vector.broadcast %cst_8 : f32 to vector<257x8xf32>
    %13 = arith.subf %12, %5 : vector<257x8xf32>
    %cst_9 = arith.constant 1.000000e+01 : f32
    %14 = vector.broadcast %cst_9 : f32 to vector<257x8xf32>
    %15 = arith.addf %14, %5 : vector<257x8xf32>
    %16 = arith.divf %13, %15 : vector<257x8xf32>
    %17 = math.log %16 : vector<257x8xf32>
    %cst_10 = arith.constant -1.000000e+01 : f32
    %18 = vector.broadcast %cst_10 : f32 to vector<257x8xf32>
    %19 = arith.mulf %18, %17 : vector<257x8xf32>
    %cst_11 = arith.constant 1.000000e+01 : f32
    %20 = vector.broadcast %cst_11 : f32 to vector<257x8xf32>
    %21 = arith.subf %20, %11 : vector<257x8xf32>
    %cst_12 = arith.constant 1.000000e+01 : f32
    %22 = vector.broadcast %cst_12 : f32 to vector<257x8xf32>
    %23 = arith.addf %22, %11 : vector<257x8xf32>
    %24 = arith.divf %21, %23 : vector<257x8xf32>
    %25 = math.log %24 : vector<257x8xf32>
    %cst_13 = arith.constant -1.000000e+01 : f32
    %26 = vector.broadcast %cst_13 : f32 to vector<257x8xf32>
    %27 = arith.mulf %26, %25 : vector<257x8xf32>
    %c0_14 = arith.constant 0 : index
    %c0_15 = arith.constant 0 : index
    %c0_16 = arith.constant 0 : index
    %28 = vector.load %arg3[%c0_14, %c0_15, %c0_16] : memref<1x257x8xf32, #tpu.memory_space<vmem>>, vector<1x257x8xf32>
    %29 = vector.shape_cast %28 : vector<1x257x8xf32> to vector<257x8xf32>
    %c0_17 = arith.constant 0 : index
    %c0_18 = arith.constant 0 : index
    %c0_19 = arith.constant 0 : index
    %30 = vector.load %arg4[%c0_17, %c0_18, %c0_19] : memref<1x257x8xf32, #tpu.memory_space<vmem>>, vector<1x257x8xf32>
    %31 = vector.shape_cast %30 : vector<1x257x8xf32> to vector<257x8xf32>
    %32 = arith.mulf %19, %29 : vector<257x8xf32>
    %33 = arith.mulf %27, %31 : vector<257x8xf32>
    %34 = arith.subf %32, %33 : vector<257x8xf32>
    %35 = arith.mulf %27, %29 : vector<257x8xf32>
    %36 = arith.mulf %19, %31 : vector<257x8xf32>
    %37 = arith.addf %35, %36 : vector<257x8xf32>
    %38 = vector.extract_strided_slice %34 {offsets = [0, 0], sizes = [256, 8], strides = [1, 1]} : vector<257x8xf32> to vector<256x8xf32>
    %39 = vector.extract_strided_slice %37 {offsets = [0, 0], sizes = [256, 8], strides = [1, 1]} : vector<257x8xf32> to vector<256x8xf32>
    %40 = vector.extract_strided_slice %34 {offsets = [256, 0], sizes = [1, 8], strides = [1, 1]} : vector<257x8xf32> to vector<1x8xf32>
    %41 = tpu.iota {dimensions = array<i32: 0>} : vector<256x8xi32>
    %c0_i32 = arith.constant 0 : i32
    %42 = vector.broadcast %c0_i32 : i32 to vector<256x8xi32>
    %43 = arith.cmpi eq, %41, %42 : vector<256x8xi32>
    %44 = vector.shape_cast %40 : vector<1x8xf32> to vector<1x8xf32>
    %45 = vector.broadcast %44 : vector<1x8xf32> to vector<256x8xf32>
    %46 = arith.select %43, %45, %39 : vector<256x8xi1>, vector<256x8xf32>
    %47 = arith.truncf %38 : vector<256x8xf32> to vector<256x8xbf16>
    %c0_20 = arith.constant 0 : index
    %c0_21 = arith.constant 0 : index
    %48 = vector.load %arg5[%c0_20, %c0_21] : memref<256x512xbf16, #tpu.memory_space<vmem>>, vector<256x512xbf16>
    %cst_22 = arith.constant dense<0.000000e+00> : vector<8x512xf32>
    %49 = tpu.matmul %47, %48, %cst_22 {dimension_numbers = #tpu.dot_dimension_numbers<[0], [0], [1], [1], [0, 1, 1, 1], [], []>} : vector<256x8xbf16>, vector<256x512xbf16>, vector<8x512xf32> -> vector<8x512xf32>
    %50 = arith.truncf %46 : vector<256x8xf32> to vector<256x8xbf16>
    %c0_23 = arith.constant 0 : index
    %c0_24 = arith.constant 0 : index
    %51 = vector.load %arg6[%c0_23, %c0_24] : memref<256x512xbf16, #tpu.memory_space<vmem>>, vector<256x512xbf16>
    %cst_25 = arith.constant dense<0.000000e+00> : vector<8x512xf32>
    %52 = tpu.matmul %50, %51, %cst_25 {dimension_numbers = #tpu.dot_dimension_numbers<[0], [0], [1], [1], [0, 1, 1, 1], [], []>} : vector<256x8xbf16>, vector<256x512xbf16>, vector<8x512xf32> -> vector<8x512xf32>
    %53 = arith.addf %49, %52 : vector<8x512xf32>
    %54 = vector.extract_strided_slice %53 {offsets = [0, 256], sizes = [8, 256], strides = [1, 1]} : vector<8x512xf32> to vector<8x256xf32>
    %55 = tpu.iota {dimensions = array<i32: 0>} : vector<8x256xi32>
    %c7_i32 = arith.constant 7 : i32
    %56 = vector.broadcast %c7_i32 : i32 to vector<8x256xi32>
    %57 = arith.cmpi eq, %55, %56 : vector<8x256xi32>
    %cst_26 = arith.constant 1.000000e+00 : f32
    %cst_27 = arith.constant 5.000000e-01 : f32
    %58 = vector.broadcast %cst_26 : f32 to vector<8x256xf32>
    %59 = vector.broadcast %cst_27 : f32 to vector<8x256xf32>
    %60 = arith.select %57, %58, %59 : vector<8x256xi1>, vector<8x256xf32>
    %61 = arith.mulf %54, %60 : vector<8x256xf32>
    %c0_28 = arith.constant 0 : index
    %c0_29 = arith.constant 0 : index
    %c0_30 = arith.constant 0 : index
    %62 = vector.load %arg7[%c0_28, %c0_29, %c0_30] : memref<1x8x256xf32, #tpu.memory_space<vmem>>, vector<1x8x256xf32>
    %63 = vector.shape_cast %62 : vector<1x8x256xf32> to vector<8x256xf32>
    %64 = vector.shape_cast %61 : vector<8x256xf32> to vector<1x8x256xf32>
    tpu.vector_store %arg7[%c0_28, %c0_29, %c0_30], %64 {strides = array<i32>} : memref<1x8x256xf32, #tpu.memory_space<vmem>>, vector<1x8x256xf32>,
    %c0_31 = arith.constant 0 : index
    %c0_32 = arith.constant 0 : index
    %c0_33 = arith.constant 0 : index
    %65 = vector.load %arg7[%c0_31, %c0_32, %c0_33] : memref<1x8x256xf32, #tpu.memory_space<vmem>>, vector<1x7x256xf32>
    %66 = vector.shape_cast %65 : vector<1x7x256xf32> to vector<7x256xf32>
    %67 = vector.extract_strided_slice %53 {offsets = [1, 0], sizes = [7, 256], strides = [1, 1]} : vector<8x512xf32> to vector<7x256xf32>
    %cst_34 = arith.constant 5.000000e-01 : f32
    %68 = vector.broadcast %cst_34 : f32 to vector<7x256xf32>
    %69 = arith.mulf %67, %68 : vector<7x256xf32>
    %70 = arith.addf %66, %69 : vector<7x256xf32>
    %c0_35 = arith.constant 0 : index
    %c0_36 = arith.constant 0 : index
    %c0_37 = arith.constant 0 : index
    %71 = vector.load %arg7[%c0_35, %c0_36, %c0_37] : memref<1x8x256xf32, #tpu.memory_space<vmem>>, vector<1x7x256xf32>
    %72 = vector.shape_cast %71 : vector<1x7x256xf32> to vector<7x256xf32>
    %73 = vector.shape_cast %70 : vector<7x256xf32> to vector<1x7x256xf32>
    tpu.vector_store %arg7[%c0_35, %c0_36, %c0_37], %73 {strides = array<i32>} : memref<1x8x256xf32, #tpu.memory_space<vmem>>, vector<1x7x256xf32>,
    return
  }
  func.func @transform_0(%arg0: i32) -> (i32, i32, i32) {
    %c0_i32 = arith.constant 0 : i32
    %c0_i32_0 = arith.constant 0 : i32
    %c0_i32_1 = arith.constant 0 : i32
    return %arg0, %c0_i32, %c0_i32_0 : i32, i32, i32
  }
  func.func @transform_1(%arg0: i32) -> (i32, i32, i32) {
    %c0_i32 = arith.constant 0 : i32
    %c0_i32_0 = arith.constant 0 : i32
    %c0_i32_1 = arith.constant 0 : i32
    return %arg0, %c0_i32, %c0_i32_0 : i32, i32, i32
  }
  func.func @transform_2(%arg0: i32) -> (i32, i32, i32) {
    %c0_i32 = arith.constant 0 : i32
    %c0_i32_0 = arith.constant 0 : i32
    %c0_i32_1 = arith.constant 0 : i32
    return %arg0, %c0_i32, %c0_i32_0 : i32, i32, i32
  }
  func.func @transform_3(%arg0: i32) -> (i32, i32, i32) {
    %c0_i32 = arith.constant 0 : i32
    %c0_i32_0 = arith.constant 0 : i32
    %c0_i32_1 = arith.constant 0 : i32
    return %arg0, %c0_i32, %c0_i32_0 : i32, i32, i32
  }
  func.func @transform_4(%arg0: i32) -> (i32, i32) {
    %c0_i32 = arith.constant 0 : i32
    %c0_i32_0 = arith.constant 0 : i32
    %c0_i32_1 = arith.constant 0 : i32
    return %c0_i32, %c0_i32_0 : i32, i32
  }
  func.func @transform_5(%arg0: i32) -> (i32, i32) {
    %c0_i32 = arith.constant 0 : i32
    %c0_i32_0 = arith.constant 0 : i32
    %c0_i32_1 = arith.constant 0 : i32
    return %c0_i32, %c0_i32_0 : i32, i32
  }
  func.func @transform_6(%arg0: i32) -> (i32, i32, i32) {
    %c0_i32 = arith.constant 0 : i32
    %c0_i32_0 = arith.constant 0 : i32
    %c0_i32_1 = arith.constant 0 : i32
    return %arg0, %c0_i32, %c0_i32_0 : i32, i32, i32
  }
}

</mosaic_0001>

<llo_original>
// kernel: tpu_custom_call.1
$region0: #{tpu_custom_call.1}
  #allocation0 [shape = 'u32[]', space=smem, size = 0x4, offset = 0x4, fixed_abs, tag = 'smem constant byte address 0x4 - core index']
  #allocation1 [shape = 'u32[144,128]{1,0:T(1,128)}', space=vmem, size = 0x12000, scoped, tag = 'internal scratch']
  %s0 = inlined_call_operand.vmem [shape: f32[2,257,8], index: 0, kind: input, shape index: {}]
  %s1 = inlined_call_operand.vmem [shape: f32[2,257,8], index: 1, kind: input, shape index: {}]
  %s2 = inlined_call_operand.vmem [shape: f32[2,257,8], index: 2, kind: input, shape index: {}]
  %s3 = inlined_call_operand.vmem [shape: f32[2,257,8], index: 3, kind: input, shape index: {}]
  %s4 = inlined_call_operand.vmem [shape: bf16[256,512], index: 4, kind: input, shape index: {}]
  %s5 = inlined_call_operand.vmem [shape: bf16[256,512], index: 5, kind: input, shape index: {}]
  %s6 = inlined_call_operand.hbm [shape: f32[2,8,256], index: 6, kind: output, shape index: {}]
  %s7 = sld [smem:[#allocation0]]
  $region57: #{tpu_custom_call.1} parent=0
    _
  %s9 = ssub.s32 1, %s7
  %s10 = scalar_select 0, %s9, %s7
  $region1: #{tpu_custom_call.1} parent=0
    #allocation2 [shape = 'u8[16384]{0}', space=vmem, size = 0x4000, scoped, tag = 'output window, operand 0']
    #allocation3 [shape = 's32[2]{0}', space=sflag, size = 0x8, scoped, tag = 'scoped memory for tpu_custom_call.1']
    %11 = vsyncpa [#allocation3], 0
    %s12 = scalar_lea.sflag [#allocation3], 1
    %13 = vsyncpa %s12, 0
    loop: start=0, step=1, limit=4
    $region2: #{tpu_custom_call.1} parent=1 // loop_pre_header
      _
    $region3: #{tpu_custom_call.1} parent=1 // loop_header
      %s15 = sphi 0, %s19
      %p16 = scmp.ge.s32.totalorder %s15, 4
      %s25 = sphi 0, %s27
      %s28 = sphi 0, %s25
      %s29 = sphi 0, %s28
      %s45 = sphi 0, %s29
      %s51 = sphi 0, %s53
      %s54 = sphi 0, %s51
      %s55 = sphi 0, %s54
      %s71 = sphi 0, %s55
      %s77 = sphi 0, %s79
      %s80 = sphi 0, %s77
      %s81 = sphi 0, %s80
      %s97 = sphi 0, %s81
      %s103 = sphi 0, %s105
      %s106 = sphi 0, %s103
      %s107 = sphi 0, %s106
      %s123 = sphi 0, %s107
      %s127 = sphi 0, %s127
      %s129 = sphi 0, %s127
      %s130 = sphi 0, %s129
      %s144 = sphi 0, %s130
      %s148 = sphi 0, %s148
      %s150 = sphi 0, %s148
      %s151 = sphi 0, %s150
      %s165 = sphi 0, %s151
      %s171 = sphi 0, %s173
      %s174 = sphi 0, %s171
      %s175 = sphi 0, %s174
      %s191 = sphi 0, %s175
    $region4: #{tpu_custom_call.1} parent=1 // loop_header_branch
      %18 = sbr.rel (%p16) target = $region8
    $region5: #{tpu_custom_call.1} parent=1 // loop_body
      %s20 = ssub.s32 %s15, 1
      %s21 = ssub.s32 %s15, 2
      %s22 = sadd.s32 %s15, 1
      %s23 = ssub.s32 %s15, %s22
      %p24 = scmp.eq.s32.totalorder %s23, 0
      %s26 = sadd.s32 %s25, 1
      %s27 = scalar_select %p24, %s25, %s26
      %p30 = pneg %p24
      %p31 = scmp.eq.s32.totalorder %s15, 1
      %p32 = por %p30, %p31
      %p33 = scmp.ne.s32.totalorder %s25, %s28
      %p34 = scmp.eq.s32.totalorder %s15, 0
      %p35 = por %p33, %p34
      %p36 = scmp.ne.s32.totalorder %s25, %s28
      %p37 = scmp.eq.s32.totalorder %s20, 1
      %p38 = por %p36, %p37
      %p39 = scmp.ne.s32.totalorder %s28, %s29
      %p40 = scmp.eq.s32.totalorder %s20, 0
      %p41 = por %p39, %p40
      %p42 = scmp.ne.s32.totalorder %s28, %s29
      %p43 = scmp.eq.s32.totalorder %s21, 1
      %p44 = por %p42, %p43
      %p46 = scmp.ne.s32.totalorder %s29, %s45
      %p47 = scmp.eq.s32.totalorder %s21, 0
      %p48 = por %p46, %p47
      %s49 = ssub.s32 %s15, %s22
      %p50 = scmp.eq.s32.totalorder %s49, 0
      %s52 = sadd.s32 %s51, 1
      %s53 = scalar_select %p50, %s51, %s52
      %p56 = pneg %p50
      %p57 = scmp.eq.s32.totalorder %s15, 1
      %p58 = por %p56, %p57
      %p59 = scmp.ne.s32.totalorder %s51, %s54
      %p60 = scmp.eq.s32.totalorder %s15, 0
      %p61 = por %p59, %p60
      %p62 = scmp.ne.s32.totalorder %s51, %s54
      %p63 = scmp.eq.s32.totalorder %s20, 1
      %p64 = por %p62, %p63
      %p65 = scmp.ne.s32.totalorder %s54, %s55
      %p66 = scmp.eq.s32.totalorder %s20, 0
      %p67 = por %p65, %p66
      %p68 = scmp.ne.s32.totalorder %s54, %s55
      %p69 = scmp.eq.s32.totalorder %s21, 1
      %p70 = por %p68, %p69
      %p72 = scmp.ne.s32.totalorder %s55, %s71
      %p73 = scmp.eq.s32.totalorder %s21, 0
      %p74 = por %p72, %p73
      %s75 = ssub.s32 %s15, %s22
      %p76 = scmp.eq.s32.totalorder %s75, 0
      %s78 = sadd.s32 %s77, 1
      %s79 = scalar_select %p76, %s77, %s78
      %p82 = pneg %p76
      %p83 = scmp.eq.s32.totalorder %s15, 1
      %p84 = por %p82, %p83
      %p85 = scmp.ne.s32.totalorder %s77, %s80
      %p86 = scmp.eq.s32.totalorder %s15, 0
      %p87 = por %p85, %p86
      %p88 = scmp.ne.s32.totalorder %s77, %s80
      %p89 = scmp.eq.s32.totalorder %s20, 1
      %p90 = por %p88, %p89
      %p91 = scmp.ne.s32.totalorder %s80, %s81
      %p92 = scmp.eq.s32.totalorder %s20, 0
      %p93 = por %p91, %p92
      %p94 = scmp.ne.s32.totalorder %s80, %s81
      %p95 = scmp.eq.s32.totalorder %s21, 1
      %p96 = por %p94, %p95
      %p98 = scmp.ne.s32.totalorder %s81, %s97
      %p99 = scmp.eq.s32.totalorder %s21, 0
      %p100 = por %p98, %p99
      %s101 = ssub.s32 %s15, %s22
      %p102 = scmp.eq.s32.totalorder %s101, 0
      %s104 = sadd.s32 %s103, 1
      %s105 = scalar_select %p102, %s103, %s104
      %p108 = pneg %p102
      %p109 = scmp.eq.s32.totalorder %s15, 1
      %p110 = por %p108, %p109
      %p111 = scmp.ne.s32.totalorder %s103, %s106
      %p112 = scmp.eq.s32.totalorder %s15, 0
      %p113 = por %p111, %p112
      %p114 = scmp.ne.s32.totalorder %s103, %s106
      %p115 = scmp.eq.s32.totalorder %s20, 1
      %p116 = por %p114, %p115
      %p117 = scmp.ne.s32.totalorder %s106, %s107
      %p118 = scmp.eq.s32.totalorder %s20, 0
      %p119 = por %p117, %p118
      %p120 = scmp.ne.s32.totalorder %s106, %s107
      %p121 = scmp.eq.s32.totalorder %s21, 1
      %p122 = por %p120, %p121
      %p124 = scmp.ne.s32.totalorder %s107, %s123
      %p125 = scmp.eq.s32.totalorder %s21, 0
      %p126 = por %p124, %p125
      %s128 = sadd.s32 %s127, 1
      %p131 = scmp.eq.s32.totalorder %s15, 1
      %p132 = scmp.ne.s32.totalorder %s127, %s129
      %p133 = scmp.eq.s32.totalorder %s15, 0
      %p134 = por %p132, %p133
      %p135 = scmp.ne.s32.totalorder %s127, %s129
      %p136 = scmp.eq.s32.totalorder %s20, 1
      %p137 = por %p135, %p136
      %p138 = scmp.ne.s32.totalorder %s129, %s130
      %p139 = scmp.eq.s32.totalorder %s20, 0
      %p140 = por %p138, %p139
      %p141 = scmp.ne.s32.totalorder %s129, %s130
      %p142 = scmp.eq.s32.totalorder %s21, 1
      %p143 = por %p141, %p142
      %p145 = scmp.ne.s32.totalorder %s130, %s144
      %p146 = scmp.eq.s32.totalorder %s21, 0
      %p147 = por %p145, %p146
      %s149 = sadd.s32 %s148, 1
      %p152 = scmp.eq.s32.totalorder %s15, 1
      %p153 = scmp.ne.s32.totalorder %s148, %s150
      %p154 = scmp.eq.s32.totalorder %s15, 0
      %p155 = por %p153, %p154
      %p156 = scmp.ne.s32.totalorder %s148, %s150
      %p157 = scmp.eq.s32.totalorder %s20, 1
      %p158 = por %p156, %p157
      %p159 = scmp.ne.s32.totalorder %s150, %s151
      %p160 = scmp.eq.s32.totalorder %s20, 0
      %p161 = por %p159, %p160
      %p162 = scmp.ne.s32.totalorder %s150, %s151
      %p163 = scmp.eq.s32.totalorder %s21, 1
      %p164 = por %p162, %p163
      %p166 = scmp.ne.s32.totalorder %s151, %s165
      %p167 = scmp.eq.s32.totalorder %s21, 0
      %p168 = por %p166, %p167
      %s169 = ssub.s32 %s15, %s22
      %p170 = scmp.eq.s32.totalorder %s169, 0
      %s172 = sadd.s32 %s171, 1
      %s173 = scalar_select %p170, %s171, %s172
      %p176 = pneg %p170
      %p177 = scmp.eq.s32.totalorder %s15, 1
      %p178 = por %p176, %p177
      %p179 = scmp.ne.s32.totalorder %s171, %s174
      %p180 = scmp.eq.s32.totalorder %s15, 0
      %p181 = por %p179, %p180
      %p182 = scmp.ne.s32.totalorder %s171, %s174
      %p183 = scmp.eq.s32.totalorder %s20, 1
      %p184 = por %p182, %p183
      %p185 = scmp.ne.s32.totalorder %s174, %s175
      %p186 = scmp.eq.s32.totalorder %s20, 0
      %p187 = por %p185, %p186
      %p188 = scmp.ne.s32.totalorder %s174, %s175
      %p189 = scmp.eq.s32.totalorder %s21, 1
      %p190 = por %p188, %p189
      %p192 = scmp.ne.s32.totalorder %s175, %s191
      %p193 = scmp.eq.s32.totalorder %s21, 0
      %p194 = por %p192, %p193
      %p195 = scmp.le.s32.totalorder 1, %s15
      %p196 = scmp.lt.s32.totalorder %s15, 3
      %p197 = pnand %p195, %p196
      %p198 = pneg %p197
      // Predicated region
      $region9: #{tpu_custom_call.1} parent=5 // pred_check
        _
      $region10: #{tpu_custom_call.1} parent=5 // pred_check_branch
        %200 = sbr.rel (%p197) target = $region12
      $region11: #{tpu_custom_call.1} parent=5 // pred_region
        %s201 = ssub.s32 %s15, 1
        // Predicated region
        $region13: #{tpu_custom_call.1} parent=11 // pred_check
          %p202 = pneg %p140
        $region14: #{tpu_custom_call.1} parent=11 // pred_check_branch
          %204 = sbr.rel (%p202) target = $region16
        $region15: #{tpu_custom_call.1} parent=11 // pred_region
          _
        $region16: #{tpu_custom_call.1} parent=11 // pred_fallthru
          _
        // Predicated region
        $region17: #{tpu_custom_call.1} parent=11 // pred_check
          %p205 = pneg %p161
        $region18: #{tpu_custom_call.1} parent=11 // pred_check_branch
          %207 = sbr.rel (%p205) target = $region20
        $region19: #{tpu_custom_call.1} parent=11 // pred_region
          _
        $region20: #{tpu_custom_call.1} parent=11 // pred_fallthru
          _
      $region12: #{tpu_custom_call.1} parent=5 // pred_fallthru
        _
      %p208 = scmp.lt.s32.totalorder %s15, 2
      // Predicated region
      $region21: #{tpu_custom_call.1} parent=5 // pred_check
        %p209 = pneg %p208
      $region22: #{tpu_custom_call.1} parent=5 // pred_check_branch
        %211 = sbr.rel (%p209) target = $region24
      $region23: #{tpu_custom_call.1} parent=5 // pred_region
        // Predicated region
        $region25: #{tpu_custom_call.1} parent=23 // pred_check
          %p212 = pneg %p35
        $region26: #{tpu_custom_call.1} parent=23 // pred_check_branch
          %214 = sbr.rel (%p212) target = $region28
        $region27: #{tpu_custom_call.1} parent=23 // pred_region
          %p215 = scmp.lt.s32.totalorder %s15, 1
          %s216 = scalar_select %p215, %s15, 1
          %s217 = smul.addr %s216, 33
          %s218 = smul.addr %s217, 8
          %s219 = scalar_lea.vmem %s0, %s218
        $region28: #{tpu_custom_call.1} parent=23 // pred_fallthru
          _
        // Predicated region
        $region29: #{tpu_custom_call.1} parent=23 // pred_check
          %p220 = pneg %p61
        $region30: #{tpu_custom_call.1} parent=23 // pred_check_branch
          %222 = sbr.rel (%p220) target = $region32
        $region31: #{tpu_custom_call.1} parent=23 // pred_region
          %p223 = scmp.lt.s32.totalorder %s15, 1
          %s224 = scalar_select %p223, %s15, 1
          %s225 = smul.addr %s224, 33
          %s226 = smul.addr %s225, 8
          %s227 = scalar_lea.vmem %s1, %s226
        $region32: #{tpu_custom_call.1} parent=23 // pred_fallthru
          _
        // Predicated region
        $region33: #{tpu_custom_call.1} parent=23 // pred_check
          %p228 = pneg %p87
        $region34: #{tpu_custom_call.1} parent=23 // pred_check_branch
          %230 = sbr.rel (%p228) target = $region36
        $region35: #{tpu_custom_call.1} parent=23 // pred_region
          %p231 = scmp.lt.s32.totalorder %s15, 1
          %s232 = scalar_select %p231, %s15, 1
          %s233 = smul.addr %s232, 33
          %s234 = smul.addr %s233, 8
          %s235 = scalar_lea.vmem %s2, %s234
        $region36: #{tpu_custom_call.1} parent=23 // pred_fallthru
          _
        // Predicated region
        $region37: #{tpu_custom_call.1} parent=23 // pred_check
          %p236 = pneg %p113
        $region38: #{tpu_custom_call.1} parent=23 // pred_check_branch
          %238 = sbr.rel (%p236) target = $region40
        $region39: #{tpu_custom_call.1} parent=23 // pred_region
          %p239 = scmp.lt.s32.totalorder %s15, 1
          %s240 = scalar_select %p239, %s15, 1
          %s241 = smul.addr %s240, 33
          %s242 = smul.addr %s241, 8
          %s243 = scalar_lea.vmem %s3, %s242
        $region40: #{tpu_custom_call.1} parent=23 // pred_fallthru
          _
      $region24: #{tpu_custom_call.1} parent=5 // pred_fallthru
        _
      %p244 = scmp.le.s32.totalorder 1, %s15
      %p245 = scmp.lt.s32.totalorder %s15, 3
      %p246 = pnand %p244, %p245
      %p247 = pneg %p246
      // Predicated region
      $region41: #{tpu_custom_call.1} parent=5 // pred_check
        _
      $region42: #{tpu_custom_call.1} parent=5 // pred_check_branch
        %249 = sbr.rel (%p246) target = $region44
      $region43: #{tpu_custom_call.1} parent=5 // pred_region
        %s250 = ssub.s32 %s15, 1
        %p251 = scmp.lt.s32.totalorder %s20, 1
        %s252 = scalar_select %p251, %s20, 1
        %s253 = smul.addr %s252, 33
        %s254 = smul.addr %s253, 8
        %s255 = scalar_lea.vmem %s0, %s254
        %p256 = pneg %p41
        %p257 = pneg %p38
        %p258 = scmp.lt.s32.totalorder %s20, 1
        %s259 = scalar_select %p258, %s20, 1
        %s260 = smul.addr %s259, 33
        %s261 = smul.addr %s260, 8
        %s262 = scalar_lea.vmem %s1, %s261
        %p263 = pneg %p67
        %p264 = pneg %p64
        %p265 = scmp.lt.s32.totalorder %s20, 1
        %s266 = scalar_select %p265, %s20, 1
        %s267 = smul.addr %s266, 33
        %s268 = smul.addr %s267, 8
        %s269 = scalar_lea.vmem %s2, %s268
        %p270 = pneg %p93
        %p271 = pneg %p90
        %p272 = scmp.lt.s32.totalorder %s20, 1
        %s273 = scalar_select %p272, %s20, 1
        %s274 = smul.addr %s273, 33
        %s275 = smul.addr %s274, 8
        %s276 = scalar_lea.vmem %s3, %s275
        %p277 = pneg %p119
        %p278 = pneg %p116
        %p279 = pneg %p140
        %p280 = pneg %p137
        %p281 = pneg %p161
        %p282 = pneg %p158
        %p283 = pneg %p187
        %p284 = pneg %p184
        %s285 = sand.u32 %s174, 1
        %s286 = scalar_lea.sflag [#allocation3], %s285
        %s287 = sand.u32 %s174, 1
        %s288 = smul.addr %s287, 16
        %s289 = scalar_lea.vmem [#allocation2], %s288
        %p290 = scmp.lt.s32.totalorder %s20, 1
        %s291 = scalar_select %p290, %s20, 1
        %s292 = smul.addr %s291, 33
        %s293 = smul.addr %s292, 8
        %s294 = scalar_lea.vmem %s0, %s293
        %p295 = scmp.lt.s32.totalorder %s20, 1
        %s296 = scalar_select %p295, %s20, 1
        %s297 = smul.addr %s296, 33
        %s298 = smul.addr %s297, 8
        %s299 = scalar_lea.vmem %s1, %s298
        %p300 = scmp.lt.s32.totalorder %s20, 1
        %s301 = scalar_select %p300, %s20, 1
        %s302 = smul.addr %s301, 33
        %s303 = smul.addr %s302, 8
        %s304 = scalar_lea.vmem %s2, %s303
        %p305 = scmp.lt.s32.totalorder %s20, 1
        %s306 = scalar_select %p305, %s20, 1
        %s307 = smul.addr %s306, 33
        %s308 = smul.addr %s307, 8
        %s309 = scalar_lea.vmem %s3, %s308
        %v310 = vld [vmem:[%s294] sm:$0xff]
        %v311 = vld [vmem:[%s294 + $0x8] sm:$0xff]
        %v312 = vld [vmem:[%s294 + $0x10] sm:$0xff]
        %v313 = vld [vmem:[%s294 + $0x18] sm:$0xff]
        %v314 = vld [vmem:[%s294 + $0x20] sm:$0xff]
        %v315 = vld [vmem:[%s294 + $0x28] sm:$0xff]
        %v316 = vld [vmem:[%s294 + $0x30] sm:$0xff]
        %v317 = vld [vmem:[%s294 + $0x38] sm:$0xff]
        %v318 = vld [vmem:[%s294 + $0x40] sm:$0xff]
        %v319 = vld [vmem:[%s294 + $0x48] sm:$0xff]
        %v320 = vld [vmem:[%s294 + $0x50] sm:$0xff]
        %v321 = vld [vmem:[%s294 + $0x58] sm:$0xff]
        %v322 = vld [vmem:[%s294 + $0x60] sm:$0xff]
        %v323 = vld [vmem:[%s294 + $0x68] sm:$0xff]
        %v324 = vld [vmem:[%s294 + $0x70] sm:$0xff]
        %v325 = vld [vmem:[%s294 + $0x78] sm:$0xff]
        %v326 = vld [vmem:[%s294 + $0x80] sm:$0xff]
        %v327 = vld [vmem:[%s294 + $0x88] sm:$0xff]
        %v328 = vld [vmem:[%s294 + $0x90] sm:$0xff]
        %v329 = vld [vmem:[%s294 + $0x98] sm:$0xff]
        %v330 = vld [vmem:[%s294 + $0xa0] sm:$0xff]
        %v331 = vld [vmem:[%s294 + $0xa8] sm:$0xff]
        %v332 = vld [vmem:[%s294 + $0xb0] sm:$0xff]
        %v333 = vld [vmem:[%s294 + $0xb8] sm:$0xff]
        %v334 = vld [vmem:[%s294 + $0xc0] sm:$0xff]
        %v335 = vld [vmem:[%s294 + $0xc8] sm:$0xff]
        %v336 = vld [vmem:[%s294 + $0xd0] sm:$0xff]
        %v337 = vld [vmem:[%s294 + $0xd8] sm:$0xff]
        %v338 = vld [vmem:[%s294 + $0xe0] sm:$0xff]
        %v339 = vld [vmem:[%s294 + $0xe8] sm:$0xff]
        %v340 = vld [vmem:[%s294 + $0xf0] sm:$0xff]
        %v341 = vld [vmem:[%s294 + $0xf8] sm:$0xff]
        %v342 = vld [vmem:[%s294 + $0x100] sm:$0x1]
        %v343 = vmax.f32 %v310, -9.9
        %v344 = vmax.f32 %v311, -9.9
        %v345 = vmax.f32 %v312, -9.9
        %v346 = vmax.f32 %v313, -9.9
        %v347 = vmax.f32 %v314, -9.9
        %v348 = vmax.f32 %v315, -9.9
        %v349 = vmax.f32 %v316, -9.9
        %v350 = vmax.f32 %v317, -9.9
        %v351 = vmax.f32 %v318, -9.9
        %v352 = vmax.f32 %v319, -9.9
        %v353 = vmax.f32 %v320, -9.9
        %v354 = vmax.f32 %v321, -9.9
        %v355 = vmax.f32 %v322, -9.9
        %v356 = vmax.f32 %v323, -9.9
        %v357 = vmax.f32 %v324, -9.9
        %v358 = vmax.f32 %v325, -9.9
        %v359 = vmax.f32 %v326, -9.9
        %v360 = vmax.f32 %v327, -9.9
        %v361 = vmax.f32 %v328, -9.9
        %v362 = vmax.f32 %v329, -9.9
        %v363 = vmax.f32 %v330, -9.9
        %v364 = vmax.f32 %v331, -9.9
        %v365 = vmax.f32 %v332, -9.9
        %v366 = vmax.f32 %v333, -9.9
        %v367 = vmax.f32 %v334, -9.9
        %v368 = vmax.f32 %v335, -9.9
        %v369 = vmax.f32 %v336, -9.9
        %v370 = vmax.f32 %v337, -9.9
        %v371 = vmax.f32 %v338, -9.9
        %v372 = vmax.f32 %v339, -9.9
        %v373 = vmax.f32 %v340, -9.9
        %v374 = vmax.f32 %v341, -9.9
        %v375 = vmax.f32 %v342, -9.9
        %v376 = vmin.f32 %v343, 9.9
        %v377 = vmin.f32 %v344, 9.9
        %v378 = vmin.f32 %v345, 9.9
        %v379 = vmin.f32 %v346, 9.9
        %v380 = vmin.f32 %v347, 9.9
        %v381 = vmin.f32 %v348, 9.9
        %v382 = vmin.f32 %v349, 9.9
        %v383 = vmin.f32 %v350, 9.9
        %v384 = vmin.f32 %v351, 9.9
        %v385 = vmin.f32 %v352, 9.9
        %v386 = vmin.f32 %v353, 9.9
        %v387 = vmin.f32 %v354, 9.9
        %v388 = vmin.f32 %v355, 9.9
        %v389 = vmin.f32 %v356, 9.9
        %v390 = vmin.f32 %v357, 9.9
        %v391 = vmin.f32 %v358, 9.9
        %v392 = vmin.f32 %v359, 9.9
        %v393 = vmin.f32 %v360, 9.9
        %v394 = vmin.f32 %v361, 9.9
        %v395 = vmin.f32 %v362, 9.9
        %v396 = vmin.f32 %v363, 9.9
        %v397 = vmin.f32 %v364, 9.9
        %v398 = vmin.f32 %v365, 9.9
        %v399 = vmin.f32 %v366, 9.9
        %v400 = vmin.f32 %v367, 9.9
        %v401 = vmin.f32 %v368, 9.9
        %v402 = vmin.f32 %v369, 9.9
        %v403 = vmin.f32 %v370, 9.9
        %v404 = vmin.f32 %v371, 9.9
        %v405 = vmin.f32 %v372, 9.9
        %v406 = vmin.f32 %v373, 9.9
        %v407 = vmin.f32 %v374, 9.9
        %v408 = vmin.f32 %v375, 9.9
        %v409 = vld [vmem:[%s299] sm:$0xff]
        %v410 = vld [vmem:[%s299 + $0x8] sm:$0xff]
        %v411 = vld [vmem:[%s299 + $0x10] sm:$0xff]
        %v412 = vld [vmem:[%s299 + $0x18] sm:$0xff]
        %v413 = vld [vmem:[%s299 + $0x20] sm:$0xff]
        %v414 = vld [vmem:[%s299 + $0x28] sm:$0xff]
        %v415 = vld [vmem:[%s299 + $0x30] sm:$0xff]
        %v416 = vld [vmem:[%s299 + $0x38] sm:$0xff]
        %v417 = vld [vmem:[%s299 + $0x40] sm:$0xff]
        %v418 = vld [vmem:[%s299 + $0x48] sm:$0xff]
        %v419 = vld [vmem:[%s299 + $0x50] sm:$0xff]
        %v420 = vld [vmem:[%s299 + $0x58] sm:$0xff]
        %v421 = vld [vmem:[%s299 + $0x60] sm:$0xff]
        %v422 = vld [vmem:[%s299 + $0x68] sm:$0xff]
        %v423 = vld [vmem:[%s299 + $0x70] sm:$0xff]
        %v424 = vld [vmem:[%s299 + $0x78] sm:$0xff]
        %v425 = vld [vmem:[%s299 + $0x80] sm:$0xff]
        %v426 = vld [vmem:[%s299 + $0x88] sm:$0xff]
        %v427 = vld [vmem:[%s299 + $0x90] sm:$0xff]
        %v428 = vld [vmem:[%s299 + $0x98] sm:$0xff]
        %v429 = vld [vmem:[%s299 + $0xa0] sm:$0xff]
        %v430 = vld [vmem:[%s299 + $0xa8] sm:$0xff]
        %v431 = vld [vmem:[%s299 + $0xb0] sm:$0xff]
        %v432 = vld [vmem:[%s299 + $0xb8] sm:$0xff]
        %v433 = vld [vmem:[%s299 + $0xc0] sm:$0xff]
        %v434 = vld [vmem:[%s299 + $0xc8] sm:$0xff]
        %v435 = vld [vmem:[%s299 + $0xd0] sm:$0xff]
        %v436 = vld [vmem:[%s299 + $0xd8] sm:$0xff]
        %v437 = vld [vmem:[%s299 + $0xe0] sm:$0xff]
        %v438 = vld [vmem:[%s299 + $0xe8] sm:$0xff]
        %v439 = vld [vmem:[%s299 + $0xf0] sm:$0xff]
        %v440 = vld [vmem:[%s299 + $0xf8] sm:$0xff]
        %v441 = vld [vmem:[%s299 + $0x100] sm:$0x1]
        %v442 = vmax.f32 %v409, -9.9
        %v443 = vmax.f32 %v410, -9.9
        %v444 = vmax.f32 %v411, -9.9
        %v445 = vmax.f32 %v412, -9.9
        %v446 = vmax.f32 %v413, -9.9
        %v447 = vmax.f32 %v414, -9.9
        %v448 = vmax.f32 %v415, -9.9
        %v449 = vmax.f32 %v416, -9.9
        %v450 = vmax.f32 %v417, -9.9
        %v451 = vmax.f32 %v418, -9.9
        %v452 = vmax.f32 %v419, -9.9
        %v453 = vmax.f32 %v420, -9.9
        %v454 = vmax.f32 %v421, -9.9
        %v455 = vmax.f32 %v422, -9.9
        %v456 = vmax.f32 %v423, -9.9
        %v457 = vmax.f32 %v424, -9.9
        %v458 = vmax.f32 %v425, -9.9
        %v459 = vmax.f32 %v426, -9.9
        %v460 = vmax.f32 %v427, -9.9
        %v461 = vmax.f32 %v428, -9.9
        %v462 = vmax.f32 %v429, -9.9
        %v463 = vmax.f32 %v430, -9.9
        %v464 = vmax.f32 %v431, -9.9
        %v465 = vmax.f32 %v432, -9.9
        %v466 = vmax.f32 %v433, -9.9
        %v467 = vmax.f32 %v434, -9.9
        %v468 = vmax.f32 %v435, -9.9
        %v469 = vmax.f32 %v436, -9.9
        %v470 = vmax.f32 %v437, -9.9
        %v471 = vmax.f32 %v438, -9.9
        %v472 = vmax.f32 %v439, -9.9
        %v473 = vmax.f32 %v440, -9.9
        %v474 = vmax.f32 %v441, -9.9
        %v475 = vmin.f32 %v442, 9.9
        %v476 = vmin.f32 %v443, 9.9
        %v477 = vmin.f32 %v444, 9.9
        %v478 = vmin.f32 %v445, 9.9
        %v479 = vmin.f32 %v446, 9.9
        %v480 = vmin.f32 %v447, 9.9
        %v481 = vmin.f32 %v448, 9.9
        %v482 = vmin.f32 %v449, 9.9
        %v483 = vmin.f32 %v450, 9.9
        %v484 = vmin.f32 %v451, 9.9
        %v485 = vmin.f32 %v452, 9.9
        %v486 = vmin.f32 %v453, 9.9
        %v487 = vmin.f32 %v454, 9.9
        %v488 = vmin.f32 %v455, 9.9
        %v489 = vmin.f32 %v456, 9.9
        %v490 = vmin.f32 %v457, 9.9
        %v491 = vmin.f32 %v458, 9.9
        %v492 = vmin.f32 %v459, 9.9
        %v493 = vmin.f32 %v460, 9.9
        %v494 = vmin.f32 %v461, 9.9
        %v495 = vmin.f32 %v462, 9.9
        %v496 = vmin.f32 %v463, 9.9
        %v497 = vmin.f32 %v464, 9.9
        %v498 = vmin.f32 %v465, 9.9
        %v499 = vmin.f32 %v466, 9.9
        %v500 = vmin.f32 %v467, 9.9
        %v501 = vmin.f32 %v468, 9.9
        %v502 = vmin.f32 %v469, 9.9
        %v503 = vmin.f32 %v470, 9.9
        %v504 = vmin.f32 %v471, 9.9
        %v505 = vmin.f32 %v472, 9.9
        %v506 = vmin.f32 %v473, 9.9
        %v507 = vmin.f32 %v474, 9.9
        %v508 = vsub.f32 10.0, %v376
        %v509 = vsub.f32 10.0, %v377
        %v510 = vsub.f32 10.0, %v378
        %v511 = vsub.f32 10.0, %v379
        %v512 = vsub.f32 10.0, %v380
        %v513 = vsub.f32 10.0, %v381
        %v514 = vsub.f32 10.0, %v382
        %v515 = vsub.f32 10.0, %v383
        %v516 = vsub.f32 10.0, %v384
        %v517 = vsub.f32 10.0, %v385
        %v518 = vsub.f32 10.0, %v386
        %v519 = vsub.f32 10.0, %v387
        %v520 = vsub.f32 10.0, %v388
        %v521 = vsub.f32 10.0, %v389
        %v522 = vsub.f32 10.0, %v390
        %v523 = vsub.f32 10.0, %v391
        %v524 = vsub.f32 10.0, %v392
        %v525 = vsub.f32 10.0, %v393
        %v526 = vsub.f32 10.0, %v394
        %v527 = vsub.f32 10.0, %v395
        %v528 = vsub.f32 10.0, %v396
        %v529 = vsub.f32 10.0, %v397
        %v530 = vsub.f32 10.0, %v398
        %v531 = vsub.f32 10.0, %v399
        %v532 = vsub.f32 10.0, %v400
        %v533 = vsub.f32 10.0, %v401
        %v534 = vsub.f32 10.0, %v402
        %v535 = vsub.f32 10.0, %v403
        %v536 = vsub.f32 10.0, %v404
        %v537 = vsub.f32 10.0, %v405
        %v538 = vsub.f32 10.0, %v406
        %v539 = vsub.f32 10.0, %v407
        %v540 = vsub.f32 10.0, %v408
        %v541 = vadd.f32 %v376, 10.0
        %v542 = vadd.f32 %v377, 10.0
        %v543 = vadd.f32 %v378, 10.0
        %v544 = vadd.f32 %v379, 10.0
        %v545 = vadd.f32 %v380, 10.0
        %v546 = vadd.f32 %v381, 10.0
        %v547 = vadd.f32 %v382, 10.0
        %v548 = vadd.f32 %v383, 10.0
        %v549 = vadd.f32 %v384, 10.0
        %v550 = vadd.f32 %v385, 10.0
        %v551 = vadd.f32 %v386, 10.0
        %v552 = vadd.f32 %v387, 10.0
        %v553 = vadd.f32 %v388, 10.0
        %v554 = vadd.f32 %v389, 10.0
        %v555 = vadd.f32 %v390, 10.0
        %v556 = vadd.f32 %v391, 10.0
        %v557 = vadd.f32 %v392, 10.0
        %v558 = vadd.f32 %v393, 10.0
        %v559 = vadd.f32 %v394, 10.0
        %v560 = vadd.f32 %v395, 10.0
        %v561 = vadd.f32 %v396, 10.0
        %v562 = vadd.f32 %v397, 10.0
        %v563 = vadd.f32 %v398, 10.0
        %v564 = vadd.f32 %v399, 10.0
        %v565 = vadd.f32 %v400, 10.0
        %v566 = vadd.f32 %v401, 10.0
        %v567 = vadd.f32 %v402, 10.0
        %v568 = vadd.f32 %v403, 10.0
        %v569 = vadd.f32 %v404, 10.0
        %v570 = vadd.f32 %v405, 10.0
        %v571 = vadd.f32 %v406, 10.0
        %v572 = vadd.f32 %v407, 10.0
        %v573 = vadd.f32 %v408, 10.0
        %v574 = vrcp.pop %v541
        %v575 = vmul.f32 %v508, %v574
        %v576 = vrcp.pop %v542
        %v577 = vmul.f32 %v509, %v576
        %v578 = vrcp.pop %v543
        %v579 = vmul.f32 %v510, %v578
        %v580 = vrcp.pop %v544
        %v581 = vmul.f32 %v511, %v580
        %v582 = vrcp.pop %v545
        %v583 = vmul.f32 %v512, %v582
        %v584 = vrcp.pop %v546
        %v585 = vmul.f32 %v513, %v584
        %v586 = vrcp.pop %v547
        %v587 = vmul.f32 %v514, %v586
        %v588 = vrcp.pop %v548
        %v589 = vmul.f32 %v515, %v588
        %v590 = vrcp.pop %v549
        %v591 = vmul.f32 %v516, %v590
        %v592 = vrcp.pop %v550
        %v593 = vmul.f32 %v517, %v592
        %v594 = vrcp.pop %v551
        %v595 = vmul.f32 %v518, %v594
        %v596 = vrcp.pop %v552
        %v597 = vmul.f32 %v519, %v596
        %v598 = vrcp.pop %v553
        %v599 = vmul.f32 %v520, %v598
        %v600 = vrcp.pop %v554
        %v601 = vmul.f32 %v521, %v600
        %v602 = vrcp.pop %v555
        %v603 = vmul.f32 %v522, %v602
        %v604 = vrcp.pop %v556
        %v605 = vmul.f32 %v523, %v604
        %v606 = vrcp.pop %v557
        %v607 = vmul.f32 %v524, %v606
        %v608 = vrcp.pop %v558
        %v609 = vmul.f32 %v525, %v608
        %v610 = vrcp.pop %v559
        %v611 = vmul.f32 %v526, %v610
        %v612 = vrcp.pop %v560
        %v613 = vmul.f32 %v527, %v612
        %v614 = vrcp.pop %v561
        %v615 = vmul.f32 %v528, %v614
        %v616 = vrcp.pop %v562
        %v617 = vmul.f32 %v529, %v616
        %v618 = vrcp.pop %v563
        %v619 = vmul.f32 %v530, %v618
        %v620 = vrcp.pop %v564
        %v621 = vmul.f32 %v531, %v620
        %v622 = vrcp.pop %v565
        %v623 = vmul.f32 %v532, %v622
        %v624 = vrcp.pop %v566
        %v625 = vmul.f32 %v533, %v624
        %v626 = vrcp.pop %v567
        %v627 = vmul.f32 %v534, %v626
        %v628 = vrcp.pop %v568
        %v629 = vmul.f32 %v535, %v628
        %v630 = vrcp.pop %v569
        %v631 = vmul.f32 %v536, %v630
        %v632 = vrcp.pop %v570
        %v633 = vmul.f32 %v537, %v632
        %v634 = vrcp.pop %v571
        %v635 = vmul.f32 %v538, %v634
        %v636 = vrcp.pop %v572
        %v637 = vmul.f32 %v539, %v636
        %v638 = vrcp.pop %v573
        %v639 = vmul.f32 %v540, %v638
        %v640 = vlog2.pop %v575
        %v641 = vmul.f32 %v640, 0.6931472
        %v642 = vlog2.pop %v577
        %v643 = vmul.f32 %v642, 0.6931472
        %v644 = vlog2.pop %v579
        %v645 = vmul.f32 %v644, 0.6931472
        %v646 = vlog2.pop %v581
        %v647 = vmul.f32 %v646, 0.6931472
        %v648 = vlog2.pop %v583
        %v649 = vmul.f32 %v648, 0.6931472
        %v650 = vlog2.pop %v585
        %v651 = vmul.f32 %v650, 0.6931472
        %v652 = vlog2.pop %v587
        %v653 = vmul.f32 %v652, 0.6931472
        %v654 = vlog2.pop %v589
        %v655 = vmul.f32 %v654, 0.6931472
        %v656 = vlog2.pop %v591
        %v657 = vmul.f32 %v656, 0.6931472
        %v658 = vlog2.pop %v593
        %v659 = vmul.f32 %v658, 0.6931472
        %v660 = vlog2.pop %v595
        %v661 = vmul.f32 %v660, 0.6931472
        %v662 = vlog2.pop %v597
        %v663 = vmul.f32 %v662, 0.6931472
        %v664 = vlog2.pop %v599
        %v665 = vmul.f32 %v664, 0.6931472
        %v666 = vlog2.pop %v601
        %v667 = vmul.f32 %v666, 0.6931472
        %v668 = vlog2.pop %v603
        %v669 = vmul.f32 %v668, 0.6931472
        %v670 = vlog2.pop %v605
        %v671 = vmul.f32 %v670, 0.6931472
        %v672 = vlog2.pop %v607
        %v673 = vmul.f32 %v672, 0.6931472
        %v674 = vlog2.pop %v609
        %v675 = vmul.f32 %v674, 0.6931472
        %v676 = vlog2.pop %v611
        %v677 = vmul.f32 %v676, 0.6931472
        %v678 = vlog2.pop %v613
        %v679 = vmul.f32 %v678, 0.6931472
        %v680 = vlog2.pop %v615
        %v681 = vmul.f32 %v680, 0.6931472
        %v682 = vlog2.pop %v617
        %v683 = vmul.f32 %v682, 0.6931472
        %v684 = vlog2.pop %v619
        %v685 = vmul.f32 %v684, 0.6931472
        %v686 = vlog2.pop %v621
        %v687 = vmul.f32 %v686, 0.6931472
        %v688 = vlog2.pop %v623
        %v689 = vmul.f32 %v688, 0.6931472
        %v690 = vlog2.pop %v625
        %v691 = vmul.f32 %v690, 0.6931472
        %v692 = vlog2.pop %v627
        %v693 = vmul.f32 %v692, 0.6931472
        %v694 = vlog2.pop %v629
        %v695 = vmul.f32 %v694, 0.6931472
        %v696 = vlog2.pop %v631
        %v697 = vmul.f32 %v696, 0.6931472
        %v698 = vlog2.pop %v633
        %v699 = vmul.f32 %v698, 0.6931472
        %v700 = vlog2.pop %v635
        %v701 = vmul.f32 %v700, 0.6931472
        %v702 = vlog2.pop %v637
        %v703 = vmul.f32 %v702, 0.6931472
        %v704 = vlog2.pop %v639
        %v705 = vmul.f32 %v704, 0.6931472
        %v706 = vmul.f32 %v641, -10.0
        %v707 = vmul.f32 %v643, -10.0
        %v708 = vmul.f32 %v645, -10.0
        %v709 = vmul.f32 %v647, -10.0
        %v710 = vmul.f32 %v649, -10.0
        %v711 = vmul.f32 %v651, -10.0
        %v712 = vmul.f32 %v653, -10.0
        %v713 = vmul.f32 %v655, -10.0
        %v714 = vmul.f32 %v657, -10.0
        %v715 = vmul.f32 %v659, -10.0
        %v716 = vmul.f32 %v661, -10.0
        %v717 = vmul.f32 %v663, -10.0
        %v718 = vmul.f32 %v665, -10.0
        %v719 = vmul.f32 %v667, -10.0
        %v720 = vmul.f32 %v669, -10.0
        %v721 = vmul.f32 %v671, -10.0
        %v722 = vmul.f32 %v673, -10.0
        %v723 = vmul.f32 %v675, -10.0
        %v724 = vmul.f32 %v677, -10.0
        %v725 = vmul.f32 %v679, -10.0
        %v726 = vmul.f32 %v681, -10.0
        %v727 = vmul.f32 %v683, -10.0
        %v728 = vmul.f32 %v685, -10.0
        %v729 = vmul.f32 %v687, -10.0
        %v730 = vmul.f32 %v689, -10.0
        %v731 = vmul.f32 %v691, -10.0
        %v732 = vmul.f32 %v693, -10.0
        %v733 = vmul.f32 %v695, -10.0
        %v734 = vmul.f32 %v697, -10.0
        %v735 = vmul.f32 %v699, -10.0
        %v736 = vmul.f32 %v701, -10.0
        %v737 = vmul.f32 %v703, -10.0
        %v738 = vmul.f32 %v705, -10.0
        %v739 = vsub.f32 10.0, %v475
        %v740 = vsub.f32 10.0, %v476
        %v741 = vsub.f32 10.0, %v477
        %v742 = vsub.f32 10.0, %v478
        %v743 = vsub.f32 10.0, %v479
        %v744 = vsub.f32 10.0, %v480
        %v745 = vsub.f32 10.0, %v481
        %v746 = vsub.f32 10.0, %v482
        %v747 = vsub.f32 10.0, %v483
        %v748 = vsub.f32 10.0, %v484
        %v749 = vsub.f32 10.0, %v485
        %v750 = vsub.f32 10.0, %v486
        %v751 = vsub.f32 10.0, %v487
        %v752 = vsub.f32 10.0, %v488
        %v753 = vsub.f32 10.0, %v489
        %v754 = vsub.f32 10.0, %v490
        %v755 = vsub.f32 10.0, %v491
        %v756 = vsub.f32 10.0, %v492
        %v757 = vsub.f32 10.0, %v493
        %v758 = vsub.f32 10.0, %v494
        %v759 = vsub.f32 10.0, %v495
        %v760 = vsub.f32 10.0, %v496
        %v761 = vsub.f32 10.0, %v497
        %v762 = vsub.f32 10.0, %v498
        %v763 = vsub.f32 10.0, %v499
        %v764 = vsub.f32 10.0, %v500
        %v765 = vsub.f32 10.0, %v501
        %v766 = vsub.f32 10.0, %v502
        %v767 = vsub.f32 10.0, %v503
        %v768 = vsub.f32 10.0, %v504
        %v769 = vsub.f32 10.0, %v505
        %v770 = vsub.f32 10.0, %v506
        %v771 = vsub.f32 10.0, %v507
        %v772 = vadd.f32 %v475, 10.0
        %v773 = vadd.f32 %v476, 10.0
        %v774 = vadd.f32 %v477, 10.0
        %v775 = vadd.f32 %v478, 10.0
        %v776 = vadd.f32 %v479, 10.0
        %v777 = vadd.f32 %v480, 10.0
        %v778 = vadd.f32 %v481, 10.0
        %v779 = vadd.f32 %v482, 10.0
        %v780 = vadd.f32 %v483, 10.0
        %v781 = vadd.f32 %v484, 10.0
        %v782 = vadd.f32 %v485, 10.0
        %v783 = vadd.f32 %v486, 10.0
        %v784 = vadd.f32 %v487, 10.0
        %v785 = vadd.f32 %v488, 10.0
        %v786 = vadd.f32 %v489, 10.0
        %v787 = vadd.f32 %v490, 10.0
        %v788 = vadd.f32 %v491, 10.0
        %v789 = vadd.f32 %v492, 10.0
        %v790 = vadd.f32 %v493, 10.0
        %v791 = vadd.f32 %v494, 10.0
        %v792 = vadd.f32 %v495, 10.0
        %v793 = vadd.f32 %v496, 10.0
        %v794 = vadd.f32 %v497, 10.0
        %v795 = vadd.f32 %v498, 10.0
        %v796 = vadd.f32 %v499, 10.0
        %v797 = vadd.f32 %v500, 10.0
        %v798 = vadd.f32 %v501, 10.0
        %v799 = vadd.f32 %v502, 10.0
        %v800 = vadd.f32 %v503, 10.0
        %v801 = vadd.f32 %v504, 10.0
        %v802 = vadd.f32 %v505, 10.0
        %v803 = vadd.f32 %v506, 10.0
        %v804 = vadd.f32 %v507, 10.0
        %v805 = vrcp.pop %v772
        %v806 = vmul.f32 %v739, %v805
        %v807 = vrcp.pop %v773
        %v808 = vmul.f32 %v740, %v807
        %v809 = vrcp.pop %v774
        %v810 = vmul.f32 %v741, %v809
        %v811 = vrcp.pop %v775
        %v812 = vmul.f32 %v742, %v811
        %v813 = vrcp.pop %v776
        %v814 = vmul.f32 %v743, %v813
        %v815 = vrcp.pop %v777
        %v816 = vmul.f32 %v744, %v815
        %v817 = vrcp.pop %v778
        %v818 = vmul.f32 %v745, %v817
        %v819 = vrcp.pop %v779
        %v820 = vmul.f32 %v746, %v819
        %v821 = vrcp.pop %v780
        %v822 = vmul.f32 %v747, %v821
        %v823 = vrcp.pop %v781
        %v824 = vmul.f32 %v748, %v823
        %v825 = vrcp.pop %v782
        %v826 = vmul.f32 %v749, %v825
        %v827 = vrcp.pop %v783
        %v828 = vmul.f32 %v750, %v827
        %v829 = vrcp.pop %v784
        %v830 = vmul.f32 %v751, %v829
        %v831 = vrcp.pop %v785
        %v832 = vmul.f32 %v752, %v831
        %v833 = vrcp.pop %v786
        %v834 = vmul.f32 %v753, %v833
        %v835 = vrcp.pop %v787
        %v836 = vmul.f32 %v754, %v835
        %v837 = vrcp.pop %v788
        %v838 = vmul.f32 %v755, %v837
        %v839 = vrcp.pop %v789
        %v840 = vmul.f32 %v756, %v839
        %v841 = vrcp.pop %v790
        %v842 = vmul.f32 %v757, %v841
        %v843 = vrcp.pop %v791
        %v844 = vmul.f32 %v758, %v843
        %v845 = vrcp.pop %v792
        %v846 = vmul.f32 %v759, %v845
        %v847 = vrcp.pop %v793
        %v848 = vmul.f32 %v760, %v847
        %v849 = vrcp.pop %v794
        %v850 = vmul.f32 %v761, %v849
        %v851 = vrcp.pop %v795
        %v852 = vmul.f32 %v762, %v851
        %v853 = vrcp.pop %v796
        %v854 = vmul.f32 %v763, %v853
        %v855 = vrcp.pop %v797
        %v856 = vmul.f32 %v764, %v855
        %v857 = vrcp.pop %v798
        %v858 = vmul.f32 %v765, %v857
        %v859 = vrcp.pop %v799
        %v860 = vmul.f32 %v766, %v859
        %v861 = vrcp.pop %v800
        %v862 = vmul.f32 %v767, %v861
        %v863 = vrcp.pop %v801
        %v864 = vmul.f32 %v768, %v863
        %v865 = vrcp.pop %v802
        %v866 = vmul.f32 %v769, %v865
        %v867 = vrcp.pop %v803
        %v868 = vmul.f32 %v770, %v867
        %v869 = vrcp.pop %v804
        %v870 = vmul.f32 %v771, %v869
        %v871 = vlog2.pop %v806
        %v872 = vmul.f32 %v871, 0.6931472
        %v873 = vlog2.pop %v808
        %v874 = vmul.f32 %v873, 0.6931472
        %v875 = vlog2.pop %v810
        %v876 = vmul.f32 %v875, 0.6931472
        %v877 = vlog2.pop %v812
        %v878 = vmul.f32 %v877, 0.6931472
        %v879 = vlog2.pop %v814
        %v880 = vmul.f32 %v879, 0.6931472
        %v881 = vlog2.pop %v816
        %v882 = vmul.f32 %v881, 0.6931472
        %v883 = vlog2.pop %v818
        %v884 = vmul.f32 %v883, 0.6931472
        %v885 = vlog2.pop %v820
        %v886 = vmul.f32 %v885, 0.6931472
        %v887 = vlog2.pop %v822
        %v888 = vmul.f32 %v887, 0.6931472
        %v889 = vlog2.pop %v824
        %v890 = vmul.f32 %v889, 0.6931472
        %v891 = vlog2.pop %v826
        %v892 = vmul.f32 %v891, 0.6931472
        %v893 = vlog2.pop %v828
        %v894 = vmul.f32 %v893, 0.6931472
        %v895 = vlog2.pop %v830
        %v896 = vmul.f32 %v895, 0.6931472
        %v897 = vlog2.pop %v832
        %v898 = vmul.f32 %v897, 0.6931472
        %v899 = vlog2.pop %v834
        %v900 = vmul.f32 %v899, 0.6931472
        %v901 = vlog2.pop %v836
        %v902 = vmul.f32 %v901, 0.6931472
        %v903 = vlog2.pop %v838
        %v904 = vmul.f32 %v903, 0.6931472
        %v905 = vlog2.pop %v840
        %v906 = vmul.f32 %v905, 0.6931472
        %v907 = vlog2.pop %v842
        %v908 = vmul.f32 %v907, 0.6931472
        %v909 = vlog2.pop %v844
        %v910 = vmul.f32 %v909, 0.6931472
        %v911 = vlog2.pop %v846
        %v912 = vmul.f32 %v911, 0.6931472
        %v913 = vlog2.pop %v848
        %v914 = vmul.f32 %v913, 0.6931472
        %v915 = vlog2.pop %v850
        %v916 = vmul.f32 %v915, 0.6931472
        %v917 = vlog2.pop %v852
        %v918 = vmul.f32 %v917, 0.6931472
        %v919 = vlog2.pop %v854
        %v920 = vmul.f32 %v919, 0.6931472
        %v921 = vlog2.pop %v856
        %v922 = vmul.f32 %v921, 0.6931472
        %v923 = vlog2.pop %v858
        %v924 = vmul.f32 %v923, 0.6931472
        %v925 = vlog2.pop %v860
        %v926 = vmul.f32 %v925, 0.6931472
        %v927 = vlog2.pop %v862
        %v928 = vmul.f32 %v927, 0.6931472
        %v929 = vlog2.pop %v864
        %v930 = vmul.f32 %v929, 0.6931472
        %v931 = vlog2.pop %v866
        %v932 = vmul.f32 %v931, 0.6931472
        %v933 = vlog2.pop %v868
        %v934 = vmul.f32 %v933, 0.6931472
        %v935 = vlog2.pop %v870
        %v936 = vmul.f32 %v935, 0.6931472
        %v937 = vmul.f32 %v872, -10.0
        %v938 = vmul.f32 %v874, -10.0
        %v939 = vmul.f32 %v876, -10.0
        %v940 = vmul.f32 %v878, -10.0
        %v941 = vmul.f32 %v880, -10.0
        %v942 = vmul.f32 %v882, -10.0
        %v943 = vmul.f32 %v884, -10.0
        %v944 = vmul.f32 %v886, -10.0
        %v945 = vmul.f32 %v888, -10.0
        %v946 = vmul.f32 %v890, -10.0
        %v947 = vmul.f32 %v892, -10.0
        %v948 = vmul.f32 %v894, -10.0
        %v949 = vmul.f32 %v896, -10.0
        %v950 = vmul.f32 %v898, -10.0
        %v951 = vmul.f32 %v900, -10.0
        %v952 = vmul.f32 %v902, -10.0
        %v953 = vmul.f32 %v904, -10.0
        %v954 = vmul.f32 %v906, -10.0
        %v955 = vmul.f32 %v908, -10.0
        %v956 = vmul.f32 %v910, -10.0
        %v957 = vmul.f32 %v912, -10.0
        %v958 = vmul.f32 %v914, -10.0
        %v959 = vmul.f32 %v916, -10.0
        %v960 = vmul.f32 %v918, -10.0
        %v961 = vmul.f32 %v920, -10.0
        %v962 = vmul.f32 %v922, -10.0
        %v963 = vmul.f32 %v924, -10.0
        %v964 = vmul.f32 %v926, -10.0
        %v965 = vmul.f32 %v928, -10.0
        %v966 = vmul.f32 %v930, -10.0
        %v967 = vmul.f32 %v932, -10.0
        %v968 = vmul.f32 %v934, -10.0
        %v969 = vmul.f32 %v936, -10.0
        %v970 = vld [vmem:[%s304] sm:$0xff]
        %v971 = vld [vmem:[%s304 + $0x8] sm:$0xff]
        %v972 = vld [vmem:[%s304 + $0x10] sm:$0xff]
        %v973 = vld [vmem:[%s304 + $0x18] sm:$0xff]
        %v974 = vld [vmem:[%s304 + $0x20] sm:$0xff]
        %v975 = vld [vmem:[%s304 + $0x28] sm:$0xff]
        %v976 = vld [vmem:[%s304 + $0x30] sm:$0xff]
        %v977 = vld [vmem:[%s304 + $0x38] sm:$0xff]
        %v978 = vld [vmem:[%s304 + $0x40] sm:$0xff]
        %v979 = vld [vmem:[%s304 + $0x48] sm:$0xff]
        %v980 = vld [vmem:[%s304 + $0x50] sm:$0xff]
        %v981 = vld [vmem:[%s304 + $0x58] sm:$0xff]
        %v982 = vld [vmem:[%s304 + $0x60] sm:$0xff]
        %v983 = vld [vmem:[%s304 + $0x68] sm:$0xff]
        %v984 = vld [vmem:[%s304 + $0x70] sm:$0xff]
        %v985 = vld [vmem:[%s304 + $0x78] sm:$0xff]
        %v986 = vld [vmem:[%s304 + $0x80] sm:$0xff]
        %v987 = vld [vmem:[%s304 + $0x88] sm:$0xff]
        %v988 = vld [vmem:[%s304 + $0x90] sm:$0xff]
        %v989 = vld [vmem:[%s304 + $0x98] sm:$0xff]
        %v990 = vld [vmem:[%s304 + $0xa0] sm:$0xff]
        %v991 = vld [vmem:[%s304 + $0xa8] sm:$0xff]
        %v992 = vld [vmem:[%s304 + $0xb0] sm:$0xff]
        %v993 = vld [vmem:[%s304 + $0xb8] sm:$0xff]
        %v994 = vld [vmem:[%s304 + $0xc0] sm:$0xff]
        %v995 = vld [vmem:[%s304 + $0xc8] sm:$0xff]
        %v996 = vld [vmem:[%s304 + $0xd0] sm:$0xff]
        %v997 = vld [vmem:[%s304 + $0xd8] sm:$0xff]
        %v998 = vld [vmem:[%s304 + $0xe0] sm:$0xff]
        %v999 = vld [vmem:[%s304 + $0xe8] sm:$0xff]
        %v1000 = vld [vmem:[%s304 + $0xf0] sm:$0xff]
        %v1001 = vld [vmem:[%s304 + $0xf8] sm:$0xff]
        %v1002 = vld [vmem:[%s304 + $0x100] sm:$0x1]
        %v1003 = vld [vmem:[%s309] sm:$0xff]
        %v1004 = vld [vmem:[%s309 + $0x8] sm:$0xff]
        %v1005 = vld [vmem:[%s309 + $0x10] sm:$0xff]
        %v1006 = vld [vmem:[%s309 + $0x18] sm:$0xff]
        %v1007 = vld [vmem:[%s309 + $0x20] sm:$0xff]
        %v1008 = vld [vmem:[%s309 + $0x28] sm:$0xff]
        %v1009 = vld [vmem:[%s309 + $0x30] sm:$0xff]
        %v1010 = vld [vmem:[%s309 + $0x38] sm:$0xff]
        %v1011 = vld [vmem:[%s309 + $0x40] sm:$0xff]
        %v1012 = vld [vmem:[%s309 + $0x48] sm:$0xff]
        %v1013 = vld [vmem:[%s309 + $0x50] sm:$0xff]
        %v1014 = vld [vmem:[%s309 + $0x58] sm:$0xff]
        %v1015 = vld [vmem:[%s309 + $0x60] sm:$0xff]
        %v1016 = vld [vmem:[%s309 + $0x68] sm:$0xff]
        %v1017 = vld [vmem:[%s309 + $0x70] sm:$0xff]
        %v1018 = vld [vmem:[%s309 + $0x78] sm:$0xff]
        %v1019 = vld [vmem:[%s309 + $0x80] sm:$0xff]
        %v1020 = vld [vmem:[%s309 + $0x88] sm:$0xff]
        %v1021 = vld [vmem:[%s309 + $0x90] sm:$0xff]
        %v1022 = vld [vmem:[%s309 + $0x98] sm:$0xff]
        %v1023 = vld [vmem:[%s309 + $0xa0] sm:$0xff]
        %v1024 = vld [vmem:[%s309 + $0xa8] sm:$0xff]
        %v1025 = vld [vmem:[%s309 + $0xb0] sm:$0xff]
        %v1026 = vld [vmem:[%s309 + $0xb8] sm:$0xff]
        %v1027 = vld [vmem:[%s309 + $0xc0] sm:$0xff]
        %v1028 = vld [vmem:[%s309 + $0xc8] sm:$0xff]
        %v1029 = vld [vmem:[%s309 + $0xd0] sm:$0xff]
        %v1030 = vld [vmem:[%s309 + $0xd8] sm:$0xff]
        %v1031 = vld [vmem:[%s309 + $0xe0] sm:$0xff]
        %v1032 = vld [vmem:[%s309 + $0xe8] sm:$0xff]
        %v1033 = vld [vmem:[%s309 + $0xf0] sm:$0xff]
        %v1034 = vld [vmem:[%s309 + $0xf8] sm:$0xff]
        %v1035 = vld [vmem:[%s309 + $0x100] sm:$0x1]
        %v1036 = vmul.f32 %v706, %v970
        %v1037 = vmul.f32 %v707, %v971
        %v1038 = vmul.f32 %v708, %v972
        %v1039 = vmul.f32 %v709, %v973
        %v1040 = vmul.f32 %v710, %v974
        %v1041 = vmul.f32 %v711, %v975
        %v1042 = vmul.f32 %v712, %v976
        %v1043 = vmul.f32 %v713, %v977
        %v1044 = vmul.f32 %v714, %v978
        %v1045 = vmul.f32 %v715, %v979
        %v1046 = vmul.f32 %v716, %v980
        %v1047 = vmul.f32 %v717, %v981
        %v1048 = vmul.f32 %v718, %v982
        %v1049 = vmul.f32 %v719, %v983
        %v1050 = vmul.f32 %v720, %v984
        %v1051 = vmul.f32 %v721, %v985
        %v1052 = vmul.f32 %v722, %v986
        %v1053 = vmul.f32 %v723, %v987
        %v1054 = vmul.f32 %v724, %v988
        %v1055 = vmul.f32 %v725, %v989
        %v1056 = vmul.f32 %v726, %v990
        %v1057 = vmul.f32 %v727, %v991
        %v1058 = vmul.f32 %v728, %v992
        %v1059 = vmul.f32 %v729, %v993
        %v1060 = vmul.f32 %v730, %v994
        %v1061 = vmul.f32 %v731, %v995
        %v1062 = vmul.f32 %v732, %v996
        %v1063 = vmul.f32 %v733, %v997
        %v1064 = vmul.f32 %v734, %v998
        %v1065 = vmul.f32 %v735, %v999
        %v1066 = vmul.f32 %v736, %v1000
        %v1067 = vmul.f32 %v737, %v1001
        %v1068 = vmul.f32 %v738, %v1002
        %v1069 = vmul.f32 %v937, %v1003
        %v1070 = vmul.f32 %v938, %v1004
        %v1071 = vmul.f32 %v939, %v1005
        %v1072 = vmul.f32 %v940, %v1006
        %v1073 = vmul.f32 %v941, %v1007
        %v1074 = vmul.f32 %v942, %v1008
        %v1075 = vmul.f32 %v943, %v1009
        %v1076 = vmul.f32 %v944, %v1010
        %v1077 = vmul.f32 %v945, %v1011
        %v1078 = vmul.f32 %v946, %v1012
        %v1079 = vmul.f32 %v947, %v1013
        %v1080 = vmul.f32 %v948, %v1014
        %v1081 = vmul.f32 %v949, %v1015
        %v1082 = vmul.f32 %v950, %v1016
        %v1083 = vmul.f32 %v951, %v1017
        %v1084 = vmul.f32 %v952, %v1018
        %v1085 = vmul.f32 %v953, %v1019
        %v1086 = vmul.f32 %v954, %v1020
        %v1087 = vmul.f32 %v955, %v1021
        %v1088 = vmul.f32 %v956, %v1022
        %v1089 = vmul.f32 %v957, %v1023
        %v1090 = vmul.f32 %v958, %v1024
        %v1091 = vmul.f32 %v959, %v1025
        %v1092 = vmul.f32 %v960, %v1026
        %v1093 = vmul.f32 %v961, %v1027
        %v1094 = vmul.f32 %v962, %v1028
        %v1095 = vmul.f32 %v963, %v1029
        %v1096 = vmul.f32 %v964, %v1030
        %v1097 = vmul.f32 %v965, %v1031
        %v1098 = vmul.f32 %v966, %v1032
        %v1099 = vmul.f32 %v967, %v1033
        %v1100 = vmul.f32 %v968, %v1034
        %v1101 = vmul.f32 %v969, %v1035
        %v1102 = vsub.f32 %v1036, %v1069
        %v1103 = vsub.f32 %v1037, %v1070
        %v1104 = vsub.f32 %v1038, %v1071
        %v1105 = vsub.f32 %v1039, %v1072
        %v1106 = vsub.f32 %v1040, %v1073
        %v1107 = vsub.f32 %v1041, %v1074
        %v1108 = vsub.f32 %v1042, %v1075
        %v1109 = vsub.f32 %v1043, %v1076
        %v1110 = vsub.f32 %v1044, %v1077
        %v1111 = vsub.f32 %v1045, %v1078
        %v1112 = vsub.f32 %v1046, %v1079
        %v1113 = vsub.f32 %v1047, %v1080
        %v1114 = vsub.f32 %v1048, %v1081
        %v1115 = vsub.f32 %v1049, %v1082
        %v1116 = vsub.f32 %v1050, %v1083
        %v1117 = vsub.f32 %v1051, %v1084
        %v1118 = vsub.f32 %v1052, %v1085
        %v1119 = vsub.f32 %v1053, %v1086
        %v1120 = vsub.f32 %v1054, %v1087
        %v1121 = vsub.f32 %v1055, %v1088
        %v1122 = vsub.f32 %v1056, %v1089
        %v1123 = vsub.f32 %v1057, %v1090
        %v1124 = vsub.f32 %v1058, %v1091
        %v1125 = vsub.f32 %v1059, %v1092
        %v1126 = vsub.f32 %v1060, %v1093
        %v1127 = vsub.f32 %v1061, %v1094
        %v1128 = vsub.f32 %v1062, %v1095
        %v1129 = vsub.f32 %v1063, %v1096
        %v1130 = vsub.f32 %v1064, %v1097
        %v1131 = vsub.f32 %v1065, %v1098
        %v1132 = vsub.f32 %v1066, %v1099
        %v1133 = vsub.f32 %v1067, %v1100
        %v1134 = vsub.f32 %v1068, %v1101
        %v1135 = vmul.f32 %v937, %v970
        %v1136 = vmul.f32 %v938, %v971
        %v1137 = vmul.f32 %v939, %v972
        %v1138 = vmul.f32 %v940, %v973
        %v1139 = vmul.f32 %v941, %v974
        %v1140 = vmul.f32 %v942, %v975
        %v1141 = vmul.f32 %v943, %v976
        %v1142 = vmul.f32 %v944, %v977
        %v1143 = vmul.f32 %v945, %v978
        %v1144 = vmul.f32 %v946, %v979
        %v1145 = vmul.f32 %v947, %v980
        %v1146 = vmul.f32 %v948, %v981
        %v1147 = vmul.f32 %v949, %v982
        %v1148 = vmul.f32 %v950, %v983
        %v1149 = vmul.f32 %v951, %v984
        %v1150 = vmul.f32 %v952, %v985
        %v1151 = vmul.f32 %v953, %v986
        %v1152 = vmul.f32 %v954, %v987
        %v1153 = vmul.f32 %v955, %v988
        %v1154 = vmul.f32 %v956, %v989
        %v1155 = vmul.f32 %v957, %v990
        %v1156 = vmul.f32 %v958, %v991
        %v1157 = vmul.f32 %v959, %v992
        %v1158 = vmul.f32 %v960, %v993
        %v1159 = vmul.f32 %v961, %v994
        %v1160 = vmul.f32 %v962, %v995
        %v1161 = vmul.f32 %v963, %v996
        %v1162 = vmul.f32 %v964, %v997
        %v1163 = vmul.f32 %v965, %v998
        %v1164 = vmul.f32 %v966, %v999
        %v1165 = vmul.f32 %v967, %v1000
        %v1166 = vmul.f32 %v968, %v1001
        %v1167 = vmul.f32 %v706, %v1003
        %v1168 = vmul.f32 %v707, %v1004
        %v1169 = vmul.f32 %v708, %v1005
        %v1170 = vmul.f32 %v709, %v1006
        %v1171 = vmul.f32 %v710, %v1007
        %v1172 = vmul.f32 %v711, %v1008
        %v1173 = vmul.f32 %v712, %v1009
        %v1174 = vmul.f32 %v713, %v1010
        %v1175 = vmul.f32 %v714, %v1011
        %v1176 = vmul.f32 %v715, %v1012
        %v1177 = vmul.f32 %v716, %v1013
        %v1178 = vmul.f32 %v717, %v1014
        %v1179 = vmul.f32 %v718, %v1015
        %v1180 = vmul.f32 %v719, %v1016
        %v1181 = vmul.f32 %v720, %v1017
        %v1182 = vmul.f32 %v721, %v1018
        %v1183 = vmul.f32 %v722, %v1019
        %v1184 = vmul.f32 %v723, %v1020
        %v1185 = vmul.f32 %v724, %v1021
        %v1186 = vmul.f32 %v725, %v1022
        %v1187 = vmul.f32 %v726, %v1023
        %v1188 = vmul.f32 %v727, %v1024
        %v1189 = vmul.f32 %v728, %v1025
        %v1190 = vmul.f32 %v729, %v1026
        %v1191 = vmul.f32 %v730, %v1027
        %v1192 = vmul.f32 %v731, %v1028
        %v1193 = vmul.f32 %v732, %v1029
        %v1194 = vmul.f32 %v733, %v1030
        %v1195 = vmul.f32 %v734, %v1031
        %v1196 = vmul.f32 %v735, %v1032
        %v1197 = vmul.f32 %v736, %v1033
        %v1198 = vmul.f32 %v737, %v1034
        %v1199 = vadd.f32 %v1135, %v1167
        %v1200 = vadd.f32 %v1136, %v1168
        %v1201 = vadd.f32 %v1137, %v1169
        %v1202 = vadd.f32 %v1138, %v1170
        %v1203 = vadd.f32 %v1139, %v1171
        %v1204 = vadd.f32 %v1140, %v1172
        %v1205 = vadd.f32 %v1141, %v1173
        %v1206 = vadd.f32 %v1142, %v1174
        %v1207 = vadd.f32 %v1143, %v1175
        %v1208 = vadd.f32 %v1144, %v1176
        %v1209 = vadd.f32 %v1145, %v1177
        %v1210 = vadd.f32 %v1146, %v1178
        %v1211 = vadd.f32 %v1147, %v1179
        %v1212 = vadd.f32 %v1148, %v1180
        %v1213 = vadd.f32 %v1149, %v1181
        %v1214 = vadd.f32 %v1150, %v1182
        %v1215 = vadd.f32 %v1151, %v1183
        %v1216 = vadd.f32 %v1152, %v1184
        %v1217 = vadd.f32 %v1153, %v1185
        %v1218 = vadd.f32 %v1154, %v1186
        %v1219 = vadd.f32 %v1155, %v1187
        %v1220 = vadd.f32 %v1156, %v1188
        %v1221 = vadd.f32 %v1157, %v1189
        %v1222 = vadd.f32 %v1158, %v1190
        %v1223 = vadd.f32 %v1159, %v1191
        %v1224 = vadd.f32 %v1160, %v1192
        %v1225 = vadd.f32 %v1161, %v1193
        %v1226 = vadd.f32 %v1162, %v1194
        %v1227 = vadd.f32 %v1163, %v1195
        %v1228 = vadd.f32 %v1164, %v1196
        %v1229 = vadd.f32 %v1165, %v1197
        %v1230 = vadd.f32 %v1166, %v1198
        %v1231 = vlaneseq
        %v1232 = vshrl.u32 %v1231, 7
        %v1233 = vadd.s32 %v1232, 8
        %v1234 = vadd.s32 %v1232, 16
        %v1235 = vadd.s32 %v1232, 24
        %v1236 = vadd.s32 %v1232, 32
        %v1237 = vadd.s32 %v1232, 40
        %v1238 = vadd.s32 %v1232, 48
        %v1239 = vadd.s32 %v1232, 56
        %v1240 = vadd.s32 %v1232, 64
        %v1241 = vadd.s32 %v1232, 72
        %v1242 = vadd.s32 %v1232, 80
        %v1243 = vadd.s32 %v1232, 88
        %v1244 = vadd.s32 %v1232, 96
        %v1245 = vadd.s32 %v1232, 104
        %v1246 = vadd.s32 %v1232, 112
        %v1247 = vadd.s32 %v1232, 120
        %v1248 = vadd.s32 %v1232, 128
        %v1249 = vadd.s32 %v1232, 136
        %v1250 = vadd.s32 %v1232, 144
        %v1251 = vadd.s32 %v1232, 152
        %v1252 = vadd.s32 %v1232, 160
        %v1253 = vadd.s32 %v1232, 168
        %v1254 = vadd.s32 %v1232, 176
        %v1255 = vadd.s32 %v1232, 184
        %v1256 = vadd.s32 %v1232, 192
        %v1257 = vadd.s32 %v1232, 200
        %v1258 = vadd.s32 %v1232, 208
        %v1259 = vadd.s32 %v1232, 216
        %v1260 = vadd.s32 %v1232, 224
        %v1261 = vadd.s32 %v1232, 232
        %v1262 = vadd.s32 %v1232, 240
        %v1263 = vadd.s32 %v1232, 248
        %vm1264 = vcmp.eq.s32.totalorder %v1232, 0
        %vm1265 = vcmp.eq.s32.totalorder %v1233, 0
        %vm1266 = vcmp.eq.s32.totalorder %v1234, 0
        %vm1267 = vcmp.eq.s32.totalorder %v1235, 0
        %vm1268 = vcmp.eq.s32.totalorder %v1236, 0
        %vm1269 = vcmp.eq.s32.totalorder %v1237, 0
        %vm1270 = vcmp.eq.s32.totalorder %v1238, 0
        %vm1271 = vcmp.eq.s32.totalorder %v1239, 0
        %vm1272 = vcmp.eq.s32.totalorder %v1240, 0
        %vm1273 = vcmp.eq.s32.totalorder %v1241, 0
        %vm1274 = vcmp.eq.s32.totalorder %v1242, 0
        %vm1275 = vcmp.eq.s32.totalorder %v1243, 0
        %vm1276 = vcmp.eq.s32.totalorder %v1244, 0
        %vm1277 = vcmp.eq.s32.totalorder %v1245, 0
        %vm1278 = vcmp.eq.s32.totalorder %v1246, 0
        %vm1279 = vcmp.eq.s32.totalorder %v1247, 0
        %vm1280 = vcmp.eq.s32.totalorder %v1248, 0
        %vm1281 = vcmp.eq.s32.totalorder %v1249, 0
        %vm1282 = vcmp.eq.s32.totalorder %v1250, 0
        %vm1283 = vcmp.eq.s32.totalorder %v1251, 0
        %vm1284 = vcmp.eq.s32.totalorder %v1252, 0
        %vm1285 = vcmp.eq.s32.totalorder %v1253, 0
        %vm1286 = vcmp.eq.s32.totalorder %v1254, 0
        %vm1287 = vcmp.eq.s32.totalorder %v1255, 0
        %vm1288 = vcmp.eq.s32.totalorder %v1256, 0
        %vm1289 = vcmp.eq.s32.totalorder %v1257, 0
        %vm1290 = vcmp.eq.s32.totalorder %v1258, 0
        %vm1291 = vcmp.eq.s32.totalorder %v1259, 0
        %vm1292 = vcmp.eq.s32.totalorder %v1260, 0
        %vm1293 = vcmp.eq.s32.totalorder %v1261, 0
        %vm1294 = vcmp.eq.s32.totalorder %v1262, 0
        %vm1295 = vcmp.eq.s32.totalorder %v1263, 0
        %v1296 = vlaneseq
        %v1297 = vshrl.u32 %v1296, 7
        %v1298 = vsub.s32 0, %v1297
        %v1299 = vrot.slane %v1134, %v1298
        %v1300 = vsel %vm1264, %v1299, %v1199
        %v1301 = vsel %vm1265, %v1299, %v1200
        %v1302 = vsel %vm1266, %v1299, %v1201
        %v1303 = vsel %vm1267, %v1299, %v1202
        %v1304 = vsel %vm1268, %v1299, %v1203
        %v1305 = vsel %vm1269, %v1299, %v1204
        %v1306 = vsel %vm1270, %v1299, %v1205
        %v1307 = vsel %vm1271, %v1299, %v1206
        %v1308 = vsel %vm1272, %v1299, %v1207
        %v1309 = vsel %vm1273, %v1299, %v1208
        %v1310 = vsel %vm1274, %v1299, %v1209
        %v1311 = vsel %vm1275, %v1299, %v1210
        %v1312 = vsel %vm1276, %v1299, %v1211
        %v1313 = vsel %vm1277, %v1299, %v1212
        %v1314 = vsel %vm1278, %v1299, %v1213
        %v1315 = vsel %vm1279, %v1299, %v1214
        %v1316 = vsel %vm1280, %v1299, %v1215
        %v1317 = vsel %vm1281, %v1299, %v1216
        %v1318 = vsel %vm1282, %v1299, %v1217
        %v1319 = vsel %vm1283, %v1299, %v1218
        %v1320 = vsel %vm1284, %v1299, %v1219
        %v1321 = vsel %vm1285, %v1299, %v1220
        %v1322 = vsel %vm1286, %v1299, %v1221
        %v1323 = vsel %vm1287, %v1299, %v1222
        %v1324 = vsel %vm1288, %v1299, %v1223
        %v1325 = vsel %vm1289, %v1299, %v1224
        %v1326 = vsel %vm1290, %v1299, %v1225
        %v1327 = vsel %vm1291, %v1299, %v1226
        %v1328 = vsel %vm1292, %v1299, %v1227
        %v1329 = vsel %vm1293, %v1299, %v1228
        %v1330 = vsel %vm1294, %v1299, %v1229
        %v1331 = vsel %vm1295, %v1299, %v1230
        %v1332 = vpack.c.bf16 %v1103, %v1102
        %v1333 = vpack.c.bf16 %v1105, %v1104
        %v1334 = vpack.c.bf16 %v1107, %v1106
        %v1335 = vpack.c.bf16 %v1109, %v1108
        %v1336 = vpack.c.bf16 %v1111, %v1110
        %v1337 = vpack.c.bf16 %v1113, %v1112
        %v1338 = vpack.c.bf16 %v1115, %v1114
        %v1339 = vpack.c.bf16 %v1117, %v1116
        %v1340 = vpack.c.bf16 %v1119, %v1118
        %v1341 = vpack.c.bf16 %v1121, %v1120
        %v1342 = vpack.c.bf16 %v1123, %v1122
        %v1343 = vpack.c.bf16 %v1125, %v1124
        %v1344 = vpack.c.bf16 %v1127, %v1126
        %v1345 = vpack.c.bf16 %v1129, %v1128
        %v1346 = vpack.c.bf16 %v1131, %v1130
        %v1347 = vpack.c.bf16 %v1133, %v1132
        %v1348 = vld [vmem:[%s4] sm:$0xff]
        %v1349 = vld [vmem:[%s4 + $0x8] sm:$0xff]
        %v1350 = vld [vmem:[%s4 + $0x10] sm:$0xff]
        %v1351 = vld [vmem:[%s4 + $0x18] sm:$0xff]
        %v1352 = vld [vmem:[%s4 + $0x20] sm:$0xff]
        %v1353 = vld [vmem:[%s4 + $0x28] sm:$0xff]
        %v1354 = vld [vmem:[%s4 + $0x30] sm:$0xff]
        %v1355 = vld [vmem:[%s4 + $0x38] sm:$0xff]
        %v1356 = vld [vmem:[%s4 + $0x40] sm:$0xff]
        %v1357 = vld [vmem:[%s4 + $0x48] sm:$0xff]
        %v1358 = vld [vmem:[%s4 + $0x50] sm:$0xff]
        %v1359 = vld [vmem:[%s4 + $0x58] sm:$0xff]
        %v1360 = vld [vmem:[%s4 + $0x60] sm:$0xff]
        %v1361 = vld [vmem:[%s4 + $0x68] sm:$0xff]
        %v1362 = vld [vmem:[%s4 + $0x70] sm:$0xff]
        %v1363 = vld [vmem:[%s4 + $0x78] sm:$0xff]
        %v1364 = vld [vmem:[%s4 + $0x80] sm:$0xff]
        %v1365 = vld [vmem:[%s4 + $0x88] sm:$0xff]
        %v1366 = vld [vmem:[%s4 + $0x90] sm:$0xff]
        %v1367 = vld [vmem:[%s4 + $0x98] sm:$0xff]
        %v1368 = vld [vmem:[%s4 + $0xa0] sm:$0xff]
        %v1369 = vld [vmem:[%s4 + $0xa8] sm:$0xff]
        %v1370 = vld [vmem:[%s4 + $0xb0] sm:$0xff]
        %v1371 = vld [vmem:[%s4 + $0xb8] sm:$0xff]
        %v1372 = vld [vmem:[%s4 + $0xc0] sm:$0xff]
        %v1373 = vld [vmem:[%s4 + $0xc8] sm:$0xff]
        %v1374 = vld [vmem:[%s4 + $0xd0] sm:$0xff]
        %v1375 = vld [vmem:[%s4 + $0xd8] sm:$0xff]
        %v1376 = vld [vmem:[%s4 + $0xe0] sm:$0xff]
        %v1377 = vld [vmem:[%s4 + $0xe8] sm:$0xff]
        %v1378 = vld [vmem:[%s4 + $0xf0] sm:$0xff]
        %v1379 = vld [vmem:[%s4 + $0xf8] sm:$0xff]
        %v1380 = vld [vmem:[%s4 + $0x100] sm:$0xff]
        %v1381 = vld [vmem:[%s4 + $0x108] sm:$0xff]
        %v1382 = vld [vmem:[%s4 + $0x110] sm:$0xff]
        %v1383 = vld [vmem:[%s4 + $0x118] sm:$0xff]
        %v1384 = vld [vmem:[%s4 + $0x120] sm:$0xff]
        %v1385 = vld [vmem:[%s4 + $0x128] sm:$0xff]
        %v1386 = vld [vmem:[%s4 + $0x130] sm:$0xff]
        %v1387 = vld [vmem:[%s4 + $0x138] sm:$0xff]
        %v1388 = vld [vmem:[%s4 + $0x140] sm:$0xff]
        %v1389 = vld [vmem:[%s4 + $0x148] sm:$0xff]
        %v1390 = vld [vmem:[%s4 + $0x150] sm:$0xff]
        %v1391 = vld [vmem:[%s4 + $0x158] sm:$0xff]
        %v1392 = vld [vmem:[%s4 + $0x160] sm:$0xff]
        %v1393 = vld [vmem:[%s4 + $0x168] sm:$0xff]
        %v1394 = vld [vmem:[%s4 + $0x170] sm:$0xff]
        %v1395 = vld [vmem:[%s4 + $0x178] sm:$0xff]
        %v1396 = vld [vmem:[%s4 + $0x180] sm:$0xff]
        %v1397 = vld [vmem:[%s4 + $0x188] sm:$0xff]
        %v1398 = vld [vmem:[%s4 + $0x190] sm:$0xff]
        %v1399 = vld [vmem:[%s4 + $0x198] sm:$0xff]
        %v1400 = vld [vmem:[%s4 + $0x1a0] sm:$0xff]
        %v1401 = vld [vmem:[%s4 + $0x1a8] sm:$0xff]
        %v1402 = vld [vmem:[%s4 + $0x1b0] sm:$0xff]
        %v1403 = vld [vmem:[%s4 + $0x1b8] sm:$0xff]
        %v1404 = vld [vmem:[%s4 + $0x1c0] sm:$0xff]
        %v1405 = vld [vmem:[%s4 + $0x1c8] sm:$0xff]
        %v1406 = vld [vmem:[%s4 + $0x1d0] sm:$0xff]
        %v1407 = vld [vmem:[%s4 + $0x1d8] sm:$0xff]
        %v1408 = vld [vmem:[%s4 + $0x1e0] sm:$0xff]
        %v1409 = vld [vmem:[%s4 + $0x1e8] sm:$0xff]
        %v1410 = vld [vmem:[%s4 + $0x1f0] sm:$0xff]
        %v1411 = vld [vmem:[%s4 + $0x1f8] sm:$0xff]
        %v1412 = vpack.c.bf16 %v1301, %v1300
        %v1413 = vpack.c.bf16 %v1303, %v1302
        %v1414 = vpack.c.bf16 %v1305, %v1304
        %v1415 = vpack.c.bf16 %v1307, %v1306
        %v1416 = vpack.c.bf16 %v1309, %v1308
        %v1417 = vpack.c.bf16 %v1311, %v1310
        %v1418 = vpack.c.bf16 %v1313, %v1312
        %v1419 = vpack.c.bf16 %v1315, %v1314
        %v1420 = vpack.c.bf16 %v1317, %v1316
        %v1421 = vpack.c.bf16 %v1319, %v1318
        %v1422 = vpack.c.bf16 %v1321, %v1320
        %v1423 = vpack.c.bf16 %v1323, %v1322
        %v1424 = vpack.c.bf16 %v1325, %v1324
        %v1425 = vpack.c.bf16 %v1327, %v1326
        %v1426 = vpack.c.bf16 %v1329, %v1328
        %v1427 = vpack.c.bf16 %v1331, %v1330
        %v1428 = vld [vmem:[%s5] sm:$0xff]
        %v1429 = vld [vmem:[%s5 + $0x8] sm:$0xff]
        %v1430 = vld [vmem:[%s5 + $0x10] sm:$0xff]
        %v1431 = vld [vmem:[%s5 + $0x18] sm:$0xff]
        %v1432 = vld [vmem:[%s5 + $0x20] sm:$0xff]
        %v1433 = vld [vmem:[%s5 + $0x28] sm:$0xff]
        %v1434 = vld [vmem:[%s5 + $0x30] sm:$0xff]
        %v1435 = vld [vmem:[%s5 + $0x38] sm:$0xff]
        %v1436 = vld [vmem:[%s5 + $0x40] sm:$0xff]
        %v1437 = vld [vmem:[%s5 + $0x48] sm:$0xff]
        %v1438 = vld [vmem:[%s5 + $0x50] sm:$0xff]
        %v1439 = vld [vmem:[%s5 + $0x58] sm:$0xff]
        %v1440 = vld [vmem:[%s5 + $0x60] sm:$0xff]
        %v1441 = vld [vmem:[%s5 + $0x68] sm:$0xff]
        %v1442 = vld [vmem:[%s5 + $0x70] sm:$0xff]
        %v1443 = vld [vmem:[%s5 + $0x78] sm:$0xff]
        %v1444 = vld [vmem:[%s5 + $0x80] sm:$0xff]
        %v1445 = vld [vmem:[%s5 + $0x88] sm:$0xff]
        %v1446 = vld [vmem:[%s5 + $0x90] sm:$0xff]
        %v1447 = vld [vmem:[%s5 + $0x98] sm:$0xff]
        %v1448 = vld [vmem:[%s5 + $0xa0] sm:$0xff]
        %v1449 = vld [vmem:[%s5 + $0xa8] sm:$0xff]
        %v1450 = vld [vmem:[%s5 + $0xb0] sm:$0xff]
        %v1451 = vld [vmem:[%s5 + $0xb8] sm:$0xff]
        %v1452 = vld [vmem:[%s5 + $0xc0] sm:$0xff]
        %v1453 = vld [vmem:[%s5 + $0xc8] sm:$0xff]
        %v1454 = vld [vmem:[%s5 + $0xd0] sm:$0xff]
        %v1455 = vld [vmem:[%s5 + $0xd8] sm:$0xff]
        %v1456 = vld [vmem:[%s5 + $0xe0] sm:$0xff]
        %v1457 = vld [vmem:[%s5 + $0xe8] sm:$0xff]
        %v1458 = vld [vmem:[%s5 + $0xf0] sm:$0xff]
        %v1459 = vld [vmem:[%s5 + $0xf8] sm:$0xff]
        %v1460 = vld [vmem:[%s5 + $0x100] sm:$0xff]
        %v1461 = vld [vmem:[%s5 + $0x108] sm:$0xff]
        %v1462 = vld [vmem:[%s5 + $0x110] sm:$0xff]
        %v1463 = vld [vmem:[%s5 + $0x118] sm:$0xff]
        %v1464 = vld [vmem:[%s5 + $0x120] sm:$0xff]
        %v1465 = vld [vmem:[%s5 + $0x128] sm:$0xff]
        %v1466 = vld [vmem:[%s5 + $0x130] sm:$0xff]
        %v1467 = vld [vmem:[%s5 + $0x138] sm:$0xff]
        %v1468 = vld [vmem:[%s5 + $0x140] sm:$0xff]
        %v1469 = vld [vmem:[%s5 + $0x148] sm:$0xff]
        %v1470 = vld [vmem:[%s5 + $0x150] sm:$0xff]
        %v1471 = vld [vmem:[%s5 + $0x158] sm:$0xff]
        %v1472 = vld [vmem:[%s5 + $0x160] sm:$0xff]
        %v1473 = vld [vmem:[%s5 + $0x168] sm:$0xff]
        %v1474 = vld [vmem:[%s5 + $0x170] sm:$0xff]
        %v1475 = vld [vmem:[%s5 + $0x178] sm:$0xff]
        %v1476 = vld [vmem:[%s5 + $0x180] sm:$0xff]
        %v1477 = vld [vmem:[%s5 + $0x188] sm:$0xff]
        %v1478 = vld [vmem:[%s5 + $0x190] sm:$0xff]
        %v1479 = vld [vmem:[%s5 + $0x198] sm:$0xff]
        %v1480 = vld [vmem:[%s5 + $0x1a0] sm:$0xff]
        %v1481 = vld [vmem:[%s5 + $0x1a8] sm:$0xff]
        %v1482 = vld [vmem:[%s5 + $0x1b0] sm:$0xff]
        %v1483 = vld [vmem:[%s5 + $0x1b8] sm:$0xff]
        %v1484 = vld [vmem:[%s5 + $0x1c0] sm:$0xff]
        %v1485 = vld [vmem:[%s5 + $0x1c8] sm:$0xff]
        %v1486 = vld [vmem:[%s5 + $0x1d0] sm:$0xff]
        %v1487 = vld [vmem:[%s5 + $0x1d8] sm:$0xff]
        %v1488 = vld [vmem:[%s5 + $0x1e0] sm:$0xff]
        %v1489 = vld [vmem:[%s5 + $0x1e8] sm:$0xff]
        %v1490 = vld [vmem:[%s5 + $0x1f0] sm:$0xff]
        %v1491 = vld [vmem:[%s5 + $0x1f8] sm:$0xff]
        %1492 = vxpose.xlu0.c.b16.start [1/8] %v1412, 128
        %1493 = vxpose.xlu0.c.b16.cont [2/8] %v1413, 128
        %1494 = vxpose.xlu0.c.b16.cont [3/8] %v1414, 128
        %1495 = vxpose.xlu0.c.b16.cont [4/8] %v1415, 128
        %1496 = vxpose.xlu0.c.b16.cont [5/8] %v1416, 128
        %1497 = vxpose.xlu0.c.b16.cont [6/8] %v1417, 128
        %1498 = vxpose.xlu0.c.b16.cont [7/8] %v1418, 128
        %1499 = vxpose.xlu0.c.b16.end [8/8] %v1419, 128
        %v1500 = vpop.trf.xlu0
        %v1501 = vpop.trf.xlu0
        %v1502 = vpop.trf.xlu0
        %v1503 = vpop.trf.xlu0
        %v1504 = vpop.trf.xlu0
        %v1505 = vpop.trf.xlu0
        %v1506 = vpop.trf.xlu0
        %v1507 = vpop.trf.xlu0
        %1508 = vxpose.xlu0.c.b16.start [1/8] %v1420, 128
        %1509 = vxpose.xlu0.c.b16.cont [2/8] %v1421, 128
        %1510 = vxpose.xlu0.c.b16.cont [3/8] %v1422, 128
        %1511 = vxpose.xlu0.c.b16.cont [4/8] %v1423, 128
        %1512 = vxpose.xlu0.c.b16.cont [5/8] %v1424, 128
        %1513 = vxpose.xlu0.c.b16.cont [6/8] %v1425, 128
        %1514 = vxpose.xlu0.c.b16.cont [7/8] %v1426, 128
        %1515 = vxpose.xlu0.c.b16.end [8/8] %v1427, 128
        %v1516 = vpop.trf.xlu0
        %v1517 = vpop.trf.xlu0
        %v1518 = vpop.trf.xlu0
        %v1519 = vpop.trf.xlu0
        %v1520 = vpop.trf.xlu0
        %v1521 = vpop.trf.xlu0
        %v1522 = vpop.trf.xlu0
        %v1523 = vpop.trf.xlu0
        %v1588 = vunpack.c.l.b16 %v1428
        %v1589 = vunpack.c.h.b16 %v1428
        %v1590 = vunpack.c.l.b16 %v1429
        %v1591 = vunpack.c.h.b16 %v1429
        %v1592 = vunpack.c.l.b16 %v1430
        %v1593 = vunpack.c.h.b16 %v1430
        %v1594 = vunpack.c.l.b16 %v1431
        %v1595 = vunpack.c.h.b16 %v1431
        %v1596 = vunpack.c.l.b16 %v1432
        %v1597 = vunpack.c.h.b16 %v1432
        %v1598 = vunpack.c.l.b16 %v1433
        %v1599 = vunpack.c.h.b16 %v1433
        %v1600 = vunpack.c.l.b16 %v1434
        %v1601 = vunpack.c.h.b16 %v1434
        %v1602 = vunpack.c.l.b16 %v1435
        %v1603 = vunpack.c.h.b16 %v1435
        %v1604 = vunpack.c.l.b16 %v1436
        %v1605 = vunpack.c.h.b16 %v1436
        %v1606 = vunpack.c.l.b16 %v1437
        %v1607 = vunpack.c.h.b16 %v1437
        %v1608 = vunpack.c.l.b16 %v1438
        %v1609 = vunpack.c.h.b16 %v1438
        %v1610 = vunpack.c.l.b16 %v1439
        %v1611 = vunpack.c.h.b16 %v1439
        %v1612 = vunpack.c.l.b16 %v1440
        %v1613 = vunpack.c.h.b16 %v1440
        %v1614 = vunpack.c.l.b16 %v1441
        %v1615 = vunpack.c.h.b16 %v1441
        %v1616 = vunpack.c.l.b16 %v1442
        %v1617 = vunpack.c.h.b16 %v1442
        %v1618 = vunpack.c.l.b16 %v1443
        %v1619 = vunpack.c.h.b16 %v1443
        %v1620 = vunpack.c.l.b16 %v1444
        %v1621 = vunpack.c.h.b16 %v1444
        %v1622 = vunpack.c.l.b16 %v1445
        %v1623 = vunpack.c.h.b16 %v1445
        %v1624 = vunpack.c.l.b16 %v1446
        %v1625 = vunpack.c.h.b16 %v1446
        %v1626 = vunpack.c.l.b16 %v1447
        %v1627 = vunpack.c.h.b16 %v1447
        %v1628 = vunpack.c.l.b16 %v1448
        %v1629 = vunpack.c.h.b16 %v1448
        %v1630 = vunpack.c.l.b16 %v1449
        %v1631 = vunpack.c.h.b16 %v1449
        %v1632 = vunpack.c.l.b16 %v1450
        %v1633 = vunpack.c.h.b16 %v1450
        %v1634 = vunpack.c.l.b16 %v1451
        %v1635 = vunpack.c.h.b16 %v1451
        %v1636 = vunpack.c.l.b16 %v1452
        %v1637 = vunpack.c.h.b16 %v1452
        %v1638 = vunpack.c.l.b16 %v1453
        %v1639 = vunpack.c.h.b16 %v1453
        %v1640 = vunpack.c.l.b16 %v1454
        %v1641 = vunpack.c.h.b16 %v1454
        %v1642 = vunpack.c.l.b16 %v1455
        %v1643 = vunpack.c.h.b16 %v1455
        %v1644 = vunpack.c.l.b16 %v1456
        %v1645 = vunpack.c.h.b16 %v1456
        %v1646 = vunpack.c.l.b16 %v1457
        %v1647 = vunpack.c.h.b16 %v1457
        %v1648 = vunpack.c.l.b16 %v1458
        %v1649 = vunpack.c.h.b16 %v1458
        %v1650 = vunpack.c.l.b16 %v1459
        %v1651 = vunpack.c.h.b16 %v1459
        %v1652 = vunpack.c.l.b16 %v1460
        %v1653 = vunpack.c.h.b16 %v1460
        %v1654 = vunpack.c.l.b16 %v1461
        %v1655 = vunpack.c.h.b16 %v1461
        %v1656 = vunpack.c.l.b16 %v1462
        %v1657 = vunpack.c.h.b16 %v1462
        %v1658 = vunpack.c.l.b16 %v1463
        %v1659 = vunpack.c.h.b16 %v1463
        %v1660 = vunpack.c.l.b16 %v1464
        %v1661 = vunpack.c.h.b16 %v1464
        %v1662 = vunpack.c.l.b16 %v1465
        %v1663 = vunpack.c.h.b16 %v1465
        %v1664 = vunpack.c.l.b16 %v1466
        %v1665 = vunpack.c.h.b16 %v1466
        %v1666 = vunpack.c.l.b16 %v1467
        %v1667 = vunpack.c.h.b16 %v1467
        %v1668 = vunpack.c.l.b16 %v1468
        %v1669 = vunpack.c.h.b16 %v1468
        %v1670 = vunpack.c.l.b16 %v1469
        %v1671 = vunpack.c.h.b16 %v1469
        %v1672 = vunpack.c.l.b16 %v1470
        %v1673 = vunpack.c.h.b16 %v1470
        %v1674 = vunpack.c.l.b16 %v1471
        %v1675 = vunpack.c.h.b16 %v1471
        %v1676 = vunpack.c.l.b16 %v1472
        %v1677 = vunpack.c.h.b16 %v1472
        %v1678 = vunpack.c.l.b16 %v1473
        %v1679 = vunpack.c.h.b16 %v1473
        %v1680 = vunpack.c.l.b16 %v1474
        %v1681 = vunpack.c.h.b16 %v1474
        %v1682 = vunpack.c.l.b16 %v1475
        %v1683 = vunpack.c.h.b16 %v1475
        %v1684 = vunpack.c.l.b16 %v1476
        %v1685 = vunpack.c.h.b16 %v1476
        %v1686 = vunpack.c.l.b16 %v1477
        %v1687 = vunpack.c.h.b16 %v1477
        %v1688 = vunpack.c.l.b16 %v1478
        %v1689 = vunpack.c.h.b16 %v1478
        %v1690 = vunpack.c.l.b16 %v1479
        %v1691 = vunpack.c.h.b16 %v1479
        %v1692 = vunpack.c.l.b16 %v1480
        %v1693 = vunpack.c.h.b16 %v1480
        %v1694 = vunpack.c.l.b16 %v1481
        %v1695 = vunpack.c.h.b16 %v1481
        %v1696 = vunpack.c.l.b16 %v1482
        %v1697 = vunpack.c.h.b16 %v1482
        %v1698 = vunpack.c.l.b16 %v1483
        %v1699 = vunpack.c.h.b16 %v1483
        %v1700 = vunpack.c.l.b16 %v1484
        %v1701 = vunpack.c.h.b16 %v1484
        %v1702 = vunpack.c.l.b16 %v1485
        %v1703 = vunpack.c.h.b16 %v1485
        %v1704 = vunpack.c.l.b16 %v1486
        %v1705 = vunpack.c.h.b16 %v1486
        %v1706 = vunpack.c.l.b16 %v1487
        %v1707 = vunpack.c.h.b16 %v1487
        %v1708 = vunpack.c.l.b16 %v1488
        %v1709 = vunpack.c.h.b16 %v1488
        %v1710 = vunpack.c.l.b16 %v1489
        %v1711 = vunpack.c.h.b16 %v1489
        %v1712 = vunpack.c.l.b16 %v1490
        %v1713 = vunpack.c.h.b16 %v1490
        %v1714 = vunpack.c.l.b16 %v1491
        %v1715 = vunpack.c.h.b16 %v1491
        %v1716 = vpack.c.b16 %v1592, %v1588
        %v1717 = vpack.c.b16 %v1593, %v1589
        %v1718 = vpack.c.b16 %v1594, %v1590
        %v1719 = vpack.c.b16 %v1595, %v1591
        %v1720 = vpack.c.b16 %v1600, %v1596
        %v1721 = vpack.c.b16 %v1601, %v1597
        %v1722 = vpack.c.b16 %v1602, %v1598
        %v1723 = vpack.c.b16 %v1603, %v1599
        %v1724 = vpack.c.b16 %v1608, %v1604
        %v1725 = vpack.c.b16 %v1609, %v1605
        %v1726 = vpack.c.b16 %v1610, %v1606
        %v1727 = vpack.c.b16 %v1611, %v1607
        %v1728 = vpack.c.b16 %v1616, %v1612
        %v1729 = vpack.c.b16 %v1617, %v1613
        %v1730 = vpack.c.b16 %v1618, %v1614
        %v1731 = vpack.c.b16 %v1619, %v1615
        %v1732 = vpack.c.b16 %v1624, %v1620
        %v1733 = vpack.c.b16 %v1625, %v1621
        %v1734 = vpack.c.b16 %v1626, %v1622
        %v1735 = vpack.c.b16 %v1627, %v1623
        %v1736 = vpack.c.b16 %v1632, %v1628
        %v1737 = vpack.c.b16 %v1633, %v1629
        %v1738 = vpack.c.b16 %v1634, %v1630
        %v1739 = vpack.c.b16 %v1635, %v1631
        %v1740 = vpack.c.b16 %v1640, %v1636
        %v1741 = vpack.c.b16 %v1641, %v1637
        %v1742 = vpack.c.b16 %v1642, %v1638
        %v1743 = vpack.c.b16 %v1643, %v1639
        %v1744 = vpack.c.b16 %v1648, %v1644
        %v1745 = vpack.c.b16 %v1649, %v1645
        %v1746 = vpack.c.b16 %v1650, %v1646
        %v1747 = vpack.c.b16 %v1651, %v1647
        %v1748 = vpack.c.b16 %v1656, %v1652
        %v1749 = vpack.c.b16 %v1657, %v1653
        %v1750 = vpack.c.b16 %v1658, %v1654
        %v1751 = vpack.c.b16 %v1659, %v1655
        %v1752 = vpack.c.b16 %v1664, %v1660
        %v1753 = vpack.c.b16 %v1665, %v1661
        %v1754 = vpack.c.b16 %v1666, %v1662
        %v1755 = vpack.c.b16 %v1667, %v1663
        %v1756 = vpack.c.b16 %v1672, %v1668
        %v1757 = vpack.c.b16 %v1673, %v1669
        %v1758 = vpack.c.b16 %v1674, %v1670
        %v1759 = vpack.c.b16 %v1675, %v1671
        %v1760 = vpack.c.b16 %v1680, %v1676
        %v1761 = vpack.c.b16 %v1681, %v1677
        %v1762 = vpack.c.b16 %v1682, %v1678
        %v1763 = vpack.c.b16 %v1683, %v1679
        %v1764 = vpack.c.b16 %v1688, %v1684
        %v1765 = vpack.c.b16 %v1689, %v1685
        %v1766 = vpack.c.b16 %v1690, %v1686
        %v1767 = vpack.c.b16 %v1691, %v1687
        %v1768 = vpack.c.b16 %v1696, %v1692
        %v1769 = vpack.c.b16 %v1697, %v1693
        %v1770 = vpack.c.b16 %v1698, %v1694
        %v1771 = vpack.c.b16 %v1699, %v1695
        %v1772 = vpack.c.b16 %v1704, %v1700
        %v1773 = vpack.c.b16 %v1705, %v1701
        %v1774 = vpack.c.b16 %v1706, %v1702
        %v1775 = vpack.c.b16 %v1707, %v1703
        %v1776 = vpack.c.b16 %v1712, %v1708
        %v1777 = vpack.c.b16 %v1713, %v1709
        %v1778 = vpack.c.b16 %v1714, %v1710
        %v1779 = vpack.c.b16 %v1715, %v1711
        %1844 = vmatprep.subr.bf16.mxu0 %v1717
        %1845 = vmatpush1.bf16.msra.mxu0 %v1716
        %1846 = vmatprep.subr.bf16.mxu0 %v1721
        %1847 = vmatpush1.bf16.msra.mxu0 %v1720
        %1848 = vmatprep.subr.bf16.mxu0 %v1725
        %1849 = vmatpush1.bf16.msra.mxu0 %v1724
        %1850 = vmatprep.subr.bf16.mxu0 %v1729
        %1851 = vmatpush1.bf16.msra.mxu0 %v1728
        %1852 = vmatprep.subr.bf16.mxu0 %v1733
        %1853 = vmatpush1.bf16.msra.mxu0 %v1732
        %1854 = vmatprep.subr.bf16.mxu0 %v1737
        %1855 = vmatpush1.bf16.msra.mxu0 %v1736
        %1856 = vmatprep.subr.bf16.mxu0 %v1741
        %1857 = vmatpush1.bf16.msra.mxu0 %v1740
        %1858 = vmatprep.subr.bf16.mxu0 %v1745
        %1859 = vmatpush1.bf16.msra.mxu0 %v1744
        %1860 = vmatprep.subr.bf16.mxu0 %v1749
        %1861 = vmatpush1.bf16.msra.mxu0 %v1748
        %1862 = vmatprep.subr.bf16.mxu0 %v1753
        %1863 = vmatpush1.bf16.msra.mxu0 %v1752
        %1864 = vmatprep.subr.bf16.mxu0 %v1757
        %1865 = vmatpush1.bf16.msra.mxu0 %v1756
        %1866 = vmatprep.subr.bf16.mxu0 %v1761
        %1867 = vmatpush1.bf16.msra.mxu0 %v1760
        %1868 = vmatprep.subr.bf16.mxu0 %v1765
        %1869 = vmatpush1.bf16.msra.mxu0 %v1764
        %1870 = vmatprep.subr.bf16.mxu0 %v1769
        %1871 = vmatpush1.bf16.msra.mxu0 %v1768
        %1872 = vmatprep.subr.bf16.mxu0 %v1773
        %1873 = vmatpush1.bf16.msra.mxu0 %v1772
        %1874 = vmatprep.subr.bf16.mxu0 %v1777
        %1875 = vmatpush1.bf16.msra.mxu0 %v1776
        %1876 = vmatprep.mubr.bf16.mxu0 %v1516
        %1877 = vmatmul.mubr.bf16.gmra.mrb[0].mxu0 %v1500
        %v1878 = vpop.f32.mrb[0].mxu0
        %v1879 = vadd.f32 0.0, %v1878
        %v1880 = vpop.f32.mrb[0].mxu0
        %v1881 = vadd.f32 0.0, %v1880
        %v1882 = vpop.f32.mrb[0].mxu0
        %v1883 = vpop.f32.mrb[0].mxu0
        %1884 = vdwg.mxu0
        %1885 = vmatprep.subr.bf16.mxu0 %v1719
        %1886 = vmatpush1.bf16.msra.mxu0 %v1718
        %1887 = vmatprep.subr.bf16.mxu0 %v1723
        %1888 = vmatpush1.bf16.msra.mxu0 %v1722
        %1889 = vmatprep.subr.bf16.mxu0 %v1727
        %1890 = vmatpush1.bf16.msra.mxu0 %v1726
        %1891 = vmatprep.subr.bf16.mxu0 %v1731
        %1892 = vmatpush1.bf16.msra.mxu0 %v1730
        %1893 = vmatprep.subr.bf16.mxu0 %v1735
        %1894 = vmatpush1.bf16.msra.mxu0 %v1734
        %1895 = vmatprep.subr.bf16.mxu0 %v1739
        %1896 = vmatpush1.bf16.msra.mxu0 %v1738
        %1897 = vmatprep.subr.bf16.mxu0 %v1743
        %1898 = vmatpush1.bf16.msra.mxu0 %v1742
        %1899 = vmatprep.subr.bf16.mxu0 %v1747
        %1900 = vmatpush1.bf16.msra.mxu0 %v1746
        %1901 = vmatprep.subr.bf16.mxu0 %v1751
        %1902 = vmatpush1.bf16.msra.mxu0 %v1750
        %1903 = vmatprep.subr.bf16.mxu0 %v1755
        %1904 = vmatpush1.bf16.msra.mxu0 %v1754
        %1905 = vmatprep.subr.bf16.mxu0 %v1759
        %1906 = vmatpush1.bf16.msra.mxu0 %v1758
        %1907 = vmatprep.subr.bf16.mxu0 %v1763
        %1908 = vmatpush1.bf16.msra.mxu0 %v1762
        %1909 = vmatprep.subr.bf16.mxu0 %v1767
        %1910 = vmatpush1.bf16.msra.mxu0 %v1766
        %1911 = vmatprep.subr.bf16.mxu0 %v1771
        %1912 = vmatpush1.bf16.msra.mxu0 %v1770
        %1913 = vmatprep.subr.bf16.mxu0 %v1775
        %1914 = vmatpush1.bf16.msra.mxu0 %v1774
        %1915 = vmatprep.subr.bf16.mxu0 %v1779
        %1916 = vmatpush1.bf16.msra.mxu0 %v1778
        %1917 = vmatprep.mubr.bf16.mxu0 %v1516
        %1918 = vmatmul.mubr.bf16.gmra.mrb[0].mxu0 %v1500
        %v1919 = vpop.f32.mrb[0].mxu0
        %v1920 = vadd.f32 0.0, %v1919
        %v1921 = vpop.f32.mrb[0].mxu0
        %v1922 = vadd.f32 0.0, %v1921
        %v1923 = vpop.f32.mrb[0].mxu0
        %v1924 = vpop.f32.mrb[0].mxu0
        %1925 = vdwg.mxu0
        %1926 = vxpose.xlu0.c.b16.start [1/8] %v1332, 128
        %1927 = vxpose.xlu0.c.b16.cont [2/8] %v1333, 128
        %1928 = vxpose.xlu0.c.b16.cont [3/8] %v1334, 128
        %1929 = vxpose.xlu0.c.b16.cont [4/8] %v1335, 128
        %1930 = vxpose.xlu0.c.b16.cont [5/8] %v1336, 128
        %1931 = vxpose.xlu0.c.b16.cont [6/8] %v1337, 128
        %1932 = vxpose.xlu0.c.b16.cont [7/8] %v1338, 128
        %1933 = vxpose.xlu0.c.b16.end [8/8] %v1339, 128
        %v1934 = vpop.trf.xlu0
        %v1935 = vpop.trf.xlu0
        %v1936 = vpop.trf.xlu0
        %v1937 = vpop.trf.xlu0
        %v1938 = vpop.trf.xlu0
        %v1939 = vpop.trf.xlu0
        %v1940 = vpop.trf.xlu0
        %v1941 = vpop.trf.xlu0
        %1942 = vxpose.xlu0.c.b16.start [1/8] %v1340, 128
        %1943 = vxpose.xlu0.c.b16.cont [2/8] %v1341, 128
        %1944 = vxpose.xlu0.c.b16.cont [3/8] %v1342, 128
        %1945 = vxpose.xlu0.c.b16.cont [4/8] %v1343, 128
        %1946 = vxpose.xlu0.c.b16.cont [5/8] %v1344, 128
        %1947 = vxpose.xlu0.c.b16.cont [6/8] %v1345, 128
        %1948 = vxpose.xlu0.c.b16.cont [7/8] %v1346, 128
        %1949 = vxpose.xlu0.c.b16.end [8/8] %v1347, 128
        %v1950 = vpop.trf.xlu0
        %v1951 = vpop.trf.xlu0
        %v1952 = vpop.trf.xlu0
        %v1953 = vpop.trf.xlu0
        %v1954 = vpop.trf.xlu0
        %v1955 = vpop.trf.xlu0
        %v1956 = vpop.trf.xlu0
        %v1957 = vpop.trf.xlu0
        %v2022 = vunpack.c.l.b16 %v1348
        %v2023 = vunpack.c.h.b16 %v1348
        %v2024 = vunpack.c.l.b16 %v1349
        %v2025 = vunpack.c.h.b16 %v1349
        %v2026 = vunpack.c.l.b16 %v1350
        %v2027 = vunpack.c.h.b16 %v1350
        %v2028 = vunpack.c.l.b16 %v1351
        %v2029 = vunpack.c.h.b16 %v1351
        %v2030 = vunpack.c.l.b16 %v1352
        %v2031 = vunpack.c.h.b16 %v1352
        %v2032 = vunpack.c.l.b16 %v1353
        %v2033 = vunpack.c.h.b16 %v1353
        %v2034 = vunpack.c.l.b16 %v1354
        %v2035 = vunpack.c.h.b16 %v1354
        %v2036 = vunpack.c.l.b16 %v1355
        %v2037 = vunpack.c.h.b16 %v1355
        %v2038 = vunpack.c.l.b16 %v1356
        %v2039 = vunpack.c.h.b16 %v1356
        %v2040 = vunpack.c.l.b16 %v1357
        %v2041 = vunpack.c.h.b16 %v1357
        %v2042 = vunpack.c.l.b16 %v1358
        %v2043 = vunpack.c.h.b16 %v1358
        %v2044 = vunpack.c.l.b16 %v1359
        %v2045 = vunpack.c.h.b16 %v1359
        %v2046 = vunpack.c.l.b16 %v1360
        %v2047 = vunpack.c.h.b16 %v1360
        %v2048 = vunpack.c.l.b16 %v1361
        %v2049 = vunpack.c.h.b16 %v1361
        %v2050 = vunpack.c.l.b16 %v1362
        %v2051 = vunpack.c.h.b16 %v1362
        %v2052 = vunpack.c.l.b16 %v1363
        %v2053 = vunpack.c.h.b16 %v1363
        %v2054 = vunpack.c.l.b16 %v1364
        %v2055 = vunpack.c.h.b16 %v1364
        %v2056 = vunpack.c.l.b16 %v1365
        %v2057 = vunpack.c.h.b16 %v1365
        %v2058 = vunpack.c.l.b16 %v1366
        %v2059 = vunpack.c.h.b16 %v1366
        %v2060 = vunpack.c.l.b16 %v1367
        %v2061 = vunpack.c.h.b16 %v1367
        %v2062 = vunpack.c.l.b16 %v1368
        %v2063 = vunpack.c.h.b16 %v1368
        %v2064 = vunpack.c.l.b16 %v1369
        %v2065 = vunpack.c.h.b16 %v1369
        %v2066 = vunpack.c.l.b16 %v1370
        %v2067 = vunpack.c.h.b16 %v1370
        %v2068 = vunpack.c.l.b16 %v1371
        %v2069 = vunpack.c.h.b16 %v1371
        %v2070 = vunpack.c.l.b16 %v1372
        %v2071 = vunpack.c.h.b16 %v1372
        %v2072 = vunpack.c.l.b16 %v1373
        %v2073 = vunpack.c.h.b16 %v1373
        %v2074 = vunpack.c.l.b16 %v1374
        %v2075 = vunpack.c.h.b16 %v1374
        %v2076 = vunpack.c.l.b16 %v1375
        %v2077 = vunpack.c.h.b16 %v1375
        %v2078 = vunpack.c.l.b16 %v1376
        %v2079 = vunpack.c.h.b16 %v1376
        %v2080 = vunpack.c.l.b16 %v1377
        %v2081 = vunpack.c.h.b16 %v1377
        %v2082 = vunpack.c.l.b16 %v1378
        %v2083 = vunpack.c.h.b16 %v1378
        %v2084 = vunpack.c.l.b16 %v1379
        %v2085 = vunpack.c.h.b16 %v1379
        %v2086 = vunpack.c.l.b16 %v1380
        %v2087 = vunpack.c.h.b16 %v1380
        %v2088 = vunpack.c.l.b16 %v1381
        %v2089 = vunpack.c.h.b16 %v1381
        %v2090 = vunpack.c.l.b16 %v1382
        %v2091 = vunpack.c.h.b16 %v1382
        %v2092 = vunpack.c.l.b16 %v1383
        %v2093 = vunpack.c.h.b16 %v1383
        %v2094 = vunpack.c.l.b16 %v1384
        %v2095 = vunpack.c.h.b16 %v1384
        %v2096 = vunpack.c.l.b16 %v1385
        %v2097 = vunpack.c.h.b16 %v1385
        %v2098 = vunpack.c.l.b16 %v1386
        %v2099 = vunpack.c.h.b16 %v1386
        %v2100 = vunpack.c.l.b16 %v1387
        %v2101 = vunpack.c.h.b16 %v1387
        %v2102 = vunpack.c.l.b16 %v1388
        %v2103 = vunpack.c.h.b16 %v1388
        %v2104 = vunpack.c.l.b16 %v1389
        %v2105 = vunpack.c.h.b16 %v1389
        %v2106 = vunpack.c.l.b16 %v1390
        %v2107 = vunpack.c.h.b16 %v1390
        %v2108 = vunpack.c.l.b16 %v1391
        %v2109 = vunpack.c.h.b16 %v1391
        %v2110 = vunpack.c.l.b16 %v1392
        %v2111 = vunpack.c.h.b16 %v1392
        %v2112 = vunpack.c.l.b16 %v1393
        %v2113 = vunpack.c.h.b16 %v1393
        %v2114 = vunpack.c.l.b16 %v1394
        %v2115 = vunpack.c.h.b16 %v1394
        %v2116 = vunpack.c.l.b16 %v1395
        %v2117 = vunpack.c.h.b16 %v1395
        %v2118 = vunpack.c.l.b16 %v1396
        %v2119 = vunpack.c.h.b16 %v1396
        %v2120 = vunpack.c.l.b16 %v1397
        %v2121 = vunpack.c.h.b16 %v1397
        %v2122 = vunpack.c.l.b16 %v1398
        %v2123 = vunpack.c.h.b16 %v1398
        %v2124 = vunpack.c.l.b16 %v1399
        %v2125 = vunpack.c.h.b16 %v1399
        %v2126 = vunpack.c.l.b16 %v1400
        %v2127 = vunpack.c.h.b16 %v1400
        %v2128 = vunpack.c.l.b16 %v1401
        %v2129 = vunpack.c.h.b16 %v1401
        %v2130 = vunpack.c.l.b16 %v1402
        %v2131 = vunpack.c.h.b16 %v1402
        %v2132 = vunpack.c.l.b16 %v1403
        %v2133 = vunpack.c.h.b16 %v1403
        %v2134 = vunpack.c.l.b16 %v1404
        %v2135 = vunpack.c.h.b16 %v1404
        %v2136 = vunpack.c.l.b16 %v1405
        %v2137 = vunpack.c.h.b16 %v1405
        %v2138 = vunpack.c.l.b16 %v1406
        %v2139 = vunpack.c.h.b16 %v1406
        %v2140 = vunpack.c.l.b16 %v1407
        %v2141 = vunpack.c.h.b16 %v1407
        %v2142 = vunpack.c.l.b16 %v1408
        %v2143 = vunpack.c.h.b16 %v1408
        %v2144 = vunpack.c.l.b16 %v1409
        %v2145 = vunpack.c.h.b16 %v1409
        %v2146 = vunpack.c.l.b16 %v1410
        %v2147 = vunpack.c.h.b16 %v1410
        %v2148 = vunpack.c.l.b16 %v1411
        %v2149 = vunpack.c.h.b16 %v1411
        %v2150 = vpack.c.b16 %v2026, %v2022
        %v2151 = vpack.c.b16 %v2027, %v2023
        %v2152 = vpack.c.b16 %v2028, %v2024
        %v2153 = vpack.c.b16 %v2029, %v2025
        %v2154 = vpack.c.b16 %v2034, %v2030
        %v2155 = vpack.c.b16 %v2035, %v2031
        %v2156 = vpack.c.b16 %v2036, %v2032
        %v2157 = vpack.c.b16 %v2037, %v2033
        %v2158 = vpack.c.b16 %v2042, %v2038
        %v2159 = vpack.c.b16 %v2043, %v2039
        %v2160 = vpack.c.b16 %v2044, %v2040
        %v2161 = vpack.c.b16 %v2045, %v2041
        %v2162 = vpack.c.b16 %v2050, %v2046
        %v2163 = vpack.c.b16 %v2051, %v2047
        %v2164 = vpack.c.b16 %v2052, %v2048
        %v2165 = vpack.c.b16 %v2053, %v2049
        %v2166 = vpack.c.b16 %v2058, %v2054
        %v2167 = vpack.c.b16 %v2059, %v2055
        %v2168 = vpack.c.b16 %v2060, %v2056
        %v2169 = vpack.c.b16 %v2061, %v2057
        %v2170 = vpack.c.b16 %v2066, %v2062
        %v2171 = vpack.c.b16 %v2067, %v2063
        %v2172 = vpack.c.b16 %v2068, %v2064
        %v2173 = vpack.c.b16 %v2069, %v2065
        %v2174 = vpack.c.b16 %v2074, %v2070
        %v2175 = vpack.c.b16 %v2075, %v2071
        %v2176 = vpack.c.b16 %v2076, %v2072
        %v2177 = vpack.c.b16 %v2077, %v2073
        %v2178 = vpack.c.b16 %v2082, %v2078
        %v2179 = vpack.c.b16 %v2083, %v2079
        %v2180 = vpack.c.b16 %v2084, %v2080
        %v2181 = vpack.c.b16 %v2085, %v2081
        %v2182 = vpack.c.b16 %v2090, %v2086
        %v2183 = vpack.c.b16 %v2091, %v2087
        %v2184 = vpack.c.b16 %v2092, %v2088
        %v2185 = vpack.c.b16 %v2093, %v2089
        %v2186 = vpack.c.b16 %v2098, %v2094
        %v2187 = vpack.c.b16 %v2099, %v2095
        %v2188 = vpack.c.b16 %v2100, %v2096
        %v2189 = vpack.c.b16 %v2101, %v2097
        %v2190 = vpack.c.b16 %v2106, %v2102
        %v2191 = vpack.c.b16 %v2107, %v2103
        %v2192 = vpack.c.b16 %v2108, %v2104
        %v2193 = vpack.c.b16 %v2109, %v2105
        %v2194 = vpack.c.b16 %v2114, %v2110
        %v2195 = vpack.c.b16 %v2115, %v2111
        %v2196 = vpack.c.b16 %v2116, %v2112
        %v2197 = vpack.c.b16 %v2117, %v2113
        %v2198 = vpack.c.b16 %v2122, %v2118
        %v2199 = vpack.c.b16 %v2123, %v2119
        %v2200 = vpack.c.b16 %v2124, %v2120
        %v2201 = vpack.c.b16 %v2125, %v2121
        %v2202 = vpack.c.b16 %v2130, %v2126
        %v2203 = vpack.c.b16 %v2131, %v2127
        %v2204 = vpack.c.b16 %v2132, %v2128
        %v2205 = vpack.c.b16 %v2133, %v2129
        %v2206 = vpack.c.b16 %v2138, %v2134
        %v2207 = vpack.c.b16 %v2139, %v2135
        %v2208 = vpack.c.b16 %v2140, %v2136
        %v2209 = vpack.c.b16 %v2141, %v2137
        %v2210 = vpack.c.b16 %v2146, %v2142
        %v2211 = vpack.c.b16 %v2147, %v2143
        %v2212 = vpack.c.b16 %v2148, %v2144
        %v2213 = vpack.c.b16 %v2149, %v2145
        %2278 = vmatprep.subr.bf16.mxu0 %v2151
        %2279 = vmatpush1.bf16.msra.mxu0 %v2150
        %2280 = vmatprep.subr.bf16.mxu0 %v2155
        %2281 = vmatpush1.bf16.msra.mxu0 %v2154
        %2282 = vmatprep.subr.bf16.mxu0 %v2159
        %2283 = vmatpush1.bf16.msra.mxu0 %v2158
        %2284 = vmatprep.subr.bf16.mxu0 %v2163
        %2285 = vmatpush1.bf16.msra.mxu0 %v2162
        %2286 = vmatprep.subr.bf16.mxu0 %v2167
        %2287 = vmatpush1.bf16.msra.mxu0 %v2166
        %2288 = vmatprep.subr.bf16.mxu0 %v2171
        %2289 = vmatpush1.bf16.msra.mxu0 %v2170
        %2290 = vmatprep.subr.bf16.mxu0 %v2175
        %2291 = vmatpush1.bf16.msra.mxu0 %v2174
        %2292 = vmatprep.subr.bf16.mxu0 %v2179
        %2293 = vmatpush1.bf16.msra.mxu0 %v2178
        %2294 = vmatprep.subr.bf16.mxu0 %v2183
        %2295 = vmatpush1.bf16.msra.mxu0 %v2182
        %2296 = vmatprep.subr.bf16.mxu0 %v2187
        %2297 = vmatpush1.bf16.msra.mxu0 %v2186
        %2298 = vmatprep.subr.bf16.mxu0 %v2191
        %2299 = vmatpush1.bf16.msra.mxu0 %v2190
        %2300 = vmatprep.subr.bf16.mxu0 %v2195
        %2301 = vmatpush1.bf16.msra.mxu0 %v2194
        %2302 = vmatprep.subr.bf16.mxu0 %v2199
        %2303 = vmatpush1.bf16.msra.mxu0 %v2198
        %2304 = vmatprep.subr.bf16.mxu0 %v2203
        %2305 = vmatpush1.bf16.msra.mxu0 %v2202
        %2306 = vmatprep.subr.bf16.mxu0 %v2207
        %2307 = vmatpush1.bf16.msra.mxu0 %v2206
        %2308 = vmatprep.subr.bf16.mxu0 %v2211
        %2309 = vmatpush1.bf16.msra.mxu0 %v2210
        %2310 = vmatprep.mubr.bf16.mxu0 %v1950
        %2311 = vmatmul.mubr.bf16.gmra.mrb[0].mxu0 %v1934
        %v2312 = vpop.f32.mrb[0].mxu0
        %v2313 = vadd.f32 %v1879, %v2312
        %v2314 = vpop.f32.mrb[0].mxu0
        %v2315 = vadd.f32 %v1881, %v2314
        %v2316 = vpop.f32.mrb[0].mxu0
        %v2317 = vpop.f32.mrb[0].mxu0
        %2318 = vdwg.mxu0
        %2319 = vmatprep.subr.bf16.mxu0 %v2153
        %2320 = vmatpush1.bf16.msra.mxu0 %v2152
        %2321 = vmatprep.subr.bf16.mxu0 %v2157
        %2322 = vmatpush1.bf16.msra.mxu0 %v2156
        %2323 = vmatprep.subr.bf16.mxu0 %v2161
        %2324 = vmatpush1.bf16.msra.mxu0 %v2160
        %2325 = vmatprep.subr.bf16.mxu0 %v2165
        %2326 = vmatpush1.bf16.msra.mxu0 %v2164
        %2327 = vmatprep.subr.bf16.mxu0 %v2169
        %2328 = vmatpush1.bf16.msra.mxu0 %v2168
        %2329 = vmatprep.subr.bf16.mxu0 %v2173
        %2330 = vmatpush1.bf16.msra.mxu0 %v2172
        %2331 = vmatprep.subr.bf16.mxu0 %v2177
        %2332 = vmatpush1.bf16.msra.mxu0 %v2176
        %2333 = vmatprep.subr.bf16.mxu0 %v2181
        %2334 = vmatpush1.bf16.msra.mxu0 %v2180
        %2335 = vmatprep.subr.bf16.mxu0 %v2185
        %2336 = vmatpush1.bf16.msra.mxu0 %v2184
        %2337 = vmatprep.subr.bf16.mxu0 %v2189
        %2338 = vmatpush1.bf16.msra.mxu0 %v2188
        %2339 = vmatprep.subr.bf16.mxu0 %v2193
        %2340 = vmatpush1.bf16.msra.mxu0 %v2192
        %2341 = vmatprep.subr.bf16.mxu0 %v2197
        %2342 = vmatpush1.bf16.msra.mxu0 %v2196
        %2343 = vmatprep.subr.bf16.mxu0 %v2201
        %2344 = vmatpush1.bf16.msra.mxu0 %v2200
        %2345 = vmatprep.subr.bf16.mxu0 %v2205
        %2346 = vmatpush1.bf16.msra.mxu0 %v2204
        %2347 = vmatprep.subr.bf16.mxu0 %v2209
        %2348 = vmatpush1.bf16.msra.mxu0 %v2208
        %2349 = vmatprep.subr.bf16.mxu0 %v2213
        %2350 = vmatpush1.bf16.msra.mxu0 %v2212
        %2351 = vmatprep.mubr.bf16.mxu0 %v1950
        %2352 = vmatmul.mubr.bf16.gmra.mrb[0].mxu0 %v1934
        %v2353 = vpop.f32.mrb[0].mxu0
        %v2354 = vadd.f32 %v1920, %v2353
        %v2355 = vpop.f32.mrb[0].mxu0
        %v2356 = vadd.f32 %v1922, %v2355
        %v2357 = vpop.f32.mrb[0].mxu0
        %v2358 = vpop.f32.mrb[0].mxu0
        %2359 = vdwg.mxu0
        %vm2360 = vcmp.eq.s32.totalorder %v1232, 7
        %v2361 = vsel %vm2360, 1.0, 0.5
        %v2362 = vmul.f32 %v2354, %v2361
        %v2363 = vmul.f32 %v2356, %v2361
        %2364 = vst [vmem:[%s289] sm:$0xff] %v2362
        %2365 = vst [vmem:[%s289 + $0x8] sm:$0xff] %v2363
        %v2366 = vld [vmem:[%s289] sm:$0x7f]
        %v2367 = vld [vmem:[%s289 + $0x8] sm:$0x7f]
        %v2368 = vmul.f32 %v2313, 0.5
        %v2369 = vmul.f32 %v2315, 0.5
        %v2372 = vrot.slane %v2368, 1
        %v2373 = vrot.slane %v2369, 1
        %v2376 = vadd.f32 %v2366, %v2372
        %v2377 = vadd.f32 %v2367, %v2373
        %2378 = vst [vmem:[%s289] sm:$0x7f] %v2376
        %2379 = vst [vmem:[%s289 + $0x8] sm:$0x7f] %v2377
        %s2380 = sand.u32 %s174, 1
        %s2381 = scalar_lea.sflag [#allocation3], %s2380
        %s2382 = sand.u32 %s174, 1
        %s2383 = smul.addr %s2382, 16
        %s2384 = scalar_lea.vmem [#allocation2], %s2383
        // Predicated region
        $region45: #{tpu_custom_call.1} parent=43 // pred_check
          %p2385 = pneg %p184
        $region46: #{tpu_custom_call.1} parent=43 // pred_check_branch
          %2387 = sbr.rel (%p2385) target = $region48
        $region47: #{tpu_custom_call.1} parent=43 // pred_region
          %s2389 = ssub.s32 256, 256
          %2390 = vsyncadd %s2381, %s2389
          %s2391 = smul.addr %s20, 2
          %s2392 = smul.addr %s2391, 128
          %s2393 = scalar_lea.hbm %s6, %s2392
          %s2395 = sshll.u32 %s2384, 4
          %s2396 = int_to_ptr.vmem [resolvable:$true] %s2395
          %2398 = dma.vmem_to_hbm [thread:$0]  %s2396, 256, %s2393, %s2381
        $region48: #{tpu_custom_call.1} parent=43 // pred_fallthru
          _
      $region44: #{tpu_custom_call.1} parent=5 // pred_fallthru
        _
      %p2399 = scmp.le.s32.totalorder 2, %s15
      // Predicated region
      $region49: #{tpu_custom_call.1} parent=5 // pred_check
        %p2400 = pneg %p2399
      $region50: #{tpu_custom_call.1} parent=5 // pred_check_branch
        %2402 = sbr.rel (%p2400) target = $region52
      $region51: #{tpu_custom_call.1} parent=5 // pred_region
        %s2403 = ssub.s32 %s15, 2
        // Predicated region
        $region53: #{tpu_custom_call.1} parent=51 // pred_check
          %p2404 = pneg %p190
        $region54: #{tpu_custom_call.1} parent=51 // pred_check_branch
          %2406 = sbr.rel (%p2404) target = $region56
        $region55: #{tpu_custom_call.1} parent=51 // pred_region
          %s2407 = sand.u32 %s175, 1
          %s2408 = scalar_lea.sflag [#allocation3], %s2407
          %s2409 = sand.u32 %s175, 1
          %s2410 = smul.addr %s2409, 16
          %s2411 = scalar_lea.vmem [#allocation2], %s2410
          %2412 = dma.done %s2408, 256
        $region56: #{tpu_custom_call.1} parent=51 // pred_fallthru
          _
      $region52: #{tpu_custom_call.1} parent=5 // pred_fallthru
        _
    $region6: #{tpu_custom_call.1} parent=1 // loop_footer
      %s19 = sadd.s32 1, %s15
    $region7: #{tpu_custom_call.1} parent=1 // loop_footer_branch
      %14 = sbr.rel target = $region3
    $region8: #{tpu_custom_call.1} parent=1 // loop_exit
      _
    %2413 = vsyncpa [#allocation3], 1
    %s2414 = scalar_lea.sflag [#allocation3], 1
    %2415 = vsyncpa %s2414, 1

</llo_original>
